<compile_context>
chip_gen: v5e
topology: v5e:2x2
jax: 0.10.0
libtpu: 0.0.40
codegen_flags: <defaults>
</compile_context>

<pallas_src>
import math

import jax
import jax.numpy as jnp
from jax.experimental import pallas as pl
from jax.experimental.pallas import tpu as pltpu


# ----------------------------- fused Pallas kernel --------------------------

def _make_explain_kernel(single_tile, tm):
    """Build the fused kernel.

    single_tile=True  -> the whole mask is one row tile; the row slab doubles
                         as the column slab (one fewer HBM read of the mask).
    single_tile=False -> an extra (N, tm) column slab of the SAME edge_mask
                         buffer is read and transposed in-kernel (XLU).
    """

    def kernel(*refs):
        if single_tile:
            (adj_ref, mask_ref, x_ref, w_ref,
             madj_ref, ypred_ref, sym_ref) = refs
            mask_col_ref = mask_ref                      # (N, N) == row slab
        else:
            (adj_ref, mask_ref, mask_col_ref, x_ref, w_ref,
             madj_ref, ypred_ref, sym_ref) = refs

        r = pl.program_id(0)
        b = pl.program_id(1)

        # ---- batch-invariant mask processing, computed once per row tile ----
        @pl.when(b == 0)
        def _():
            s = jax.nn.sigmoid(mask_ref[...])            # (tm, N)   mask_act='sigmoid'
            st = jax.nn.sigmoid(mask_col_ref[...]).T     # (N, tm).T -> (tm, N) via XLU
            sym = (s + st) * 0.5                         # symmetrize
            rows = jax.lax.broadcasted_iota(jnp.int32, sym.shape, 0) + r * tm
            cols = jax.lax.broadcasted_iota(jnp.int32, sym.shape, 1)
            sym_ref[...] = jnp.where(rows == cols, 0.0, sym)   # * (1 - eye(N))

        # ---- masked adjacency (stays resident, also written out) ------------
        madj = adj_ref[0] * sym_ref[...]
        madj_ref[0] = madj.astype(madj_ref.dtype)

        # ---- surrogate GCN: reassociated as  madj @ (x @ W) ------------------
        xw = jnp.dot(x_ref[0], w_ref[...], preferred_element_type=jnp.float32)
        ypred_ref[0] = jnp.dot(madj, xw,
                               preferred_element_type=jnp.float32
                               ).astype(ypred_ref.dtype)

    return kernel


# ------------------------------ JAX wrapper ---------------------------------

def _pick_tm(n):
    """Largest row tile that keeps ~9 double-buffered (tm, n) f32 slabs
    (≈ 36*tm*n bytes) inside a ~36 MiB VMEM budget."""
    if n <= 512:
        return n                                  # whole mask as one tile
    elem_budget = 1 << 20                         # tm * n <= 1M f32 elements
    for tm in (512, 256, 128):
        if n % tm == 0 and tm * n <= elem_budget:
            return tm
    for tm in (512, 256, 128):
        if n % tm == 0:
            return tm
    return n                                      # unaligned N: single tile


def explain_module_forward(adj, x, edge_mask, feat_mask, gcn_w):
    """ExplainModule.forward (unconstrained=False, mask_features=False).

    adj: (B, N, N) f32, x: (B, N, F) f32, edge_mask: (N, N) f32, gcn_w: (F, C).
    Returns (ypred, masked_adj), mirroring the PyTorch module.
    feat_mask is carried as a parameter (constant-0 init) but, as in the
    reference forward with mask_features=False, it is not applied to x.
    """
    del feat_mask  # not applied in the reference forward path
    B, N, _ = adj.shape
    F = x.shape[-1]
    C = gcn_w.shape[-1]

    tm = _pick_tm(N)
    nt = N // tm
    single_tile = (nt == 1)

    # Lane-dense ypred store: pad weight columns to a multiple of 128.
    c_pad = max(128, ((C + 127) // 128) * 128)
    w_pad = jnp.zeros((F, c_pad), dtype=jnp.float32).at[:, :C].set(
        gcn_w.astype(jnp.float32))

    in_specs = [
        pl.BlockSpec((1, tm, N), lambda r, b: (b, r, 0)),   # adj row slab
        pl.BlockSpec((tm, N), lambda r, b: (r, 0)),         # edge_mask row slab
    ]
    operands = [adj, edge_mask]
    if not single_tile:
        # Column slab of the SAME edge_mask buffer (transposed in-kernel).
        in_specs.append(pl.BlockSpec((N, tm), lambda r, b: (0, r)))
        operands.append(edge_mask)
    in_specs += [
        pl.BlockSpec((1, N, F), lambda r, b: (b, 0, 0)),    # node features
        pl.BlockSpec((F, c_pad), lambda r, b: (0, 0)),      # padded GCN weight
    ]
    operands += [x, w_pad]

    madj, ypred_pad = pl.pallas_call(
        _make_explain_kernel(single_tile, tm),
        out_shape=(
            jax.ShapeDtypeStruct((B, N, N), adj.dtype),        # masked_adj
            jax.ShapeDtypeStruct((B, N, c_pad), jnp.float32),  # ypred (padded)
        ),
        grid_spec=pltpu.PrefetchScalarGridSpec(
            num_scalar_prefetch=0,
            grid=(nt, B),   # row tiles outer (parallel), batch inner (arbitrary)
            in_specs=in_specs,
            out_specs=[
                pl.BlockSpec((1, tm, N), lambda r, b: (b, r, 0)),      # madj
                pl.BlockSpec((1, tm, c_pad), lambda r, b: (b, r, 0)),  # ypred
            ],
            scratch_shapes=[pltpu.VMEM((tm, N), jnp.float32)],  # hoisted mask
        ),
        compiler_params=pltpu.CompilerParams(
            # row-tile axis parallel (megacore); batch axis carries the hoisted
            # mask scratch so it must stay sequential within a core.
            dimension_semantics=("parallel", "arbitrary"),
            vmem_limit_bytes=48 * 1024 * 1024,
        ),
    )(*operands)

    return ypred_pad[..., :C], madj


# --------------------------- parameter construction -------------------------

def build_params(num_nodes, feat_dim, num_classes, key):
    k_mask, k_w = jax.random.split(key)
    # construct_edge_mask(init_strategy='normal'):
    #   std = gain('relu') * sqrt(2 / (N + N)); mask ~ Normal(1.0, std)
    std = math.sqrt(2.0) * math.sqrt(2.0 / (num_nodes + num_nodes))
    edge_mask = 1.0 + std * jax.random.normal(k_mask, (num_nodes, num_nodes),
                                              dtype=jnp.float32)
    # construct_feat_mask(init_strategy='constant'): zeros(feat_dim)
    feat_mask = jnp.zeros((feat_dim,), dtype=jnp.float32)
    # deterministic surrogate GCN weight
    gcn_w = 0.05 * jax.random.normal(k_w, (feat_dim, num_classes),
                                     dtype=jnp.float32)
    return edge_mask, feat_mask, gcn_w


# ------------------------------------ main -----------------------------------

if __name__ == "__main__":
    key = jax.random.PRNGKey(0)
    B, N, F, C = 2, 256, 32, 8   # graphs, nodes, feature dim, classes

    k_adj, k_x, k_params = jax.random.split(key, 3)
    # symmetric 0/1 adjacency with empty diagonal (per graph)
    a = (jax.random.uniform(k_adj, (B, N, N)) > 0.7).astype(jnp.float32)
    eye = jnp.eye(N, dtype=jnp.float32)
    adj = jnp.maximum(a, jnp.swapaxes(a, -1, -2)) * (1.0 - eye)
    x = jax.random.normal(k_x, (B, N, F), dtype=jnp.float32)

    edge_mask, feat_mask, gcn_w = build_params(N, F, C, k_params)

    ypred, madj = explain_module_forward(adj, x, edge_mask, feat_mask, gcn_w)
    ypred = jax.block_until_ready(ypred)
    madj = jax.block_until_ready(madj)

    # correctness check against plain-JAX reference of _masked_adj / forward
    sym = jax.nn.sigmoid(edge_mask)
    sym = (sym + sym.T) / 2.0
    ref_madj = adj * sym * (1.0 - eye)
    assert jnp.allclose(madj, ref_madj, atol=1e-5, rtol=1e-5)
    ref_ypred = jnp.einsum("bij,bjf,fc->bic", ref_madj, x, gcn_w)
    assert jnp.allclose(ypred, ref_ypred, atol=1e-3, rtol=1e-3)

    print("KERNEL_OK")
</pallas_src>

<mosaic_0001>
module attributes {stable_mosaic.version = 11 : i64} {
  func.func @kernel(%arg0: i32, %arg1: i32, %arg2: memref<1x256x256xf32, #tpu.memory_space<vmem>>, %arg3: memref<256x256xf32, #tpu.memory_space<vmem>>, %arg4: memref<1x256x32xf32, #tpu.memory_space<vmem>>, %arg5: memref<32x128xf32, #tpu.memory_space<vmem>>, %arg6: memref<1x256x256xf32, #tpu.memory_space<vmem>>, %arg7: memref<1x256x128xf32, #tpu.memory_space<vmem>>, %arg8: memref<256x256xf32, #tpu.memory_space<vmem>>) attributes {dimension_semantics = [#tpu.dimension_semantics<parallel>, #tpu.dimension_semantics<arbitrary>], iteration_bounds = array<i64: 1, 2>, scalar_prefetch = 0 : i64, scratch_operands = 1 : i64, tpu.core_type = #tpu.core_type<tc>, window_params = [{transform_indices = @transform_0, window_bounds = array<i64: 1, 256, 256>}, {transform_indices = @transform_1, window_bounds = array<i64: 256, 256>}, {transform_indices = @transform_2, window_bounds = array<i64: 1, 256, 32>}, {pipeline_mode = #tpu.pipeline_mode<synchronous>, transform_indices = @transform_3, window_bounds = array<i64: 32, 128>}, {transform_indices = @transform_4, window_bounds = array<i64: 1, 256, 256>}, {transform_indices = @transform_5, window_bounds = array<i64: 1, 256, 128>}]} {
    %c0_i32 = arith.constant 0 : i32
    %0 = arith.cmpi eq, %arg1, %c0_i32 : i32
    %1 = arith.extui %0 : i1 to i32
    %c0_i32_0 = arith.constant 0 : i32
    %2 = arith.cmpi ne, %1, %c0_i32_0 : i32
    scf.if %2 {
      %c0_17 = arith.constant 0 : index
      %c0_18 = arith.constant 0 : index
      %18 = vector.load %arg3[%c0_17, %c0_18] : memref<256x256xf32, #tpu.memory_space<vmem>>, vector<256x256xf32>
      %19 = arith.negf %18 : vector<256x256xf32>
      %20 = math.exp %19 : vector<256x256xf32>
      %cst_19 = arith.constant 1.000000e+00 : f32
      %21 = vector.broadcast %cst_19 : f32 to vector<256x256xf32>
      %22 = arith.addf %21, %20 : vector<256x256xf32>
      %23 = arith.divf %21, %22 : vector<256x256xf32>
      %c0_20 = arith.constant 0 : index
      %c0_21 = arith.constant 0 : index
      %24 = vector.load %arg3[%c0_20, %c0_21] : memref<256x256xf32, #tpu.memory_space<vmem>>, vector<256x256xf32>
      %25 = arith.negf %24 : vector<256x256xf32>
      %26 = math.exp %25 : vector<256x256xf32>
      %cst_22 = arith.constant 1.000000e+00 : f32
      %27 = vector.broadcast %cst_22 : f32 to vector<256x256xf32>
      %28 = arith.addf %27, %26 : vector<256x256xf32>
      %29 = arith.divf %27, %28 : vector<256x256xf32>
      %30 = tpu.transpose %29, [1, 0] : vector<256x256xf32> -> vector<256x256xf32>
      %31 = arith.addf %23, %30 : vector<256x256xf32>
      %cst_23 = arith.constant 5.000000e-01 : f32
      %32 = vector.broadcast %cst_23 : f32 to vector<256x256xf32>
      %33 = arith.mulf %31, %32 : vector<256x256xf32>
      %34 = tpu.iota {dimensions = array<i32: 0>} : vector<256x256xi32>
      %c256_i32 = arith.constant 256 : i32
      %35 = arith.muli %arg0, %c256_i32 : i32
      %36 = vector.broadcast %35 : i32 to vector<256x256xi32>
      %37 = arith.addi %34, %36 : vector<256x256xi32>
      %38 = tpu.iota {dimensions = array<i32: 1>} : vector<256x256xi32>
      %39 = arith.cmpi eq, %37, %38 : vector<256x256xi32>
      %cst_24 = arith.constant 0.000000e+00 : f32
      %40 = vector.broadcast %cst_24 : f32 to vector<256x256xf32>
      %41 = arith.select %39, %40, %33 : vector<256x256xi1>, vector<256x256xf32>
      %c0_25 = arith.constant 0 : index
      %c0_26 = arith.constant 0 : index
      %42 = vector.load %arg8[%c0_25, %c0_26] : memref<256x256xf32, #tpu.memory_space<vmem>>, vector<256x256xf32>
      tpu.vector_store %arg8[%c0_25, %c0_26], %41 {strides = array<i32>} : memref<256x256xf32, #tpu.memory_space<vmem>>, vector<256x256xf32>,
    } else {
    }
    %c0 = arith.constant 0 : index
    %c0_1 = arith.constant 0 : index
    %c0_2 = arith.constant 0 : index
    %3 = vector.load %arg2[%c0, %c0_1, %c0_2] : memref<1x256x256xf32, #tpu.memory_space<vmem>>, vector<1x256x256xf32>
    %4 = vector.shape_cast %3 : vector<1x256x256xf32> to vector<256x256xf32>
    %c0_3 = arith.constant 0 : index
    %c0_4 = arith.constant 0 : index
    %5 = vector.load %arg8[%c0_3, %c0_4] : memref<256x256xf32, #tpu.memory_space<vmem>>, vector<256x256xf32>
    %6 = arith.mulf %4, %5 : vector<256x256xf32>
    %c0_5 = arith.constant 0 : index
    %c0_6 = arith.constant 0 : index
    %c0_7 = arith.constant 0 : index
    %7 = vector.load %arg6[%c0_5, %c0_6, %c0_7] : memref<1x256x256xf32, #tpu.memory_space<vmem>>, vector<1x256x256xf32>
    %8 = vector.shape_cast %7 : vector<1x256x256xf32> to vector<256x256xf32>
    %9 = vector.shape_cast %6 : vector<256x256xf32> to vector<1x256x256xf32>
    tpu.vector_store %arg6[%c0_5, %c0_6, %c0_7], %9 {strides = array<i32>} : memref<1x256x256xf32, #tpu.memory_space<vmem>>, vector<1x256x256xf32>,
    %c0_8 = arith.constant 0 : index
    %c0_9 = arith.constant 0 : index
    %c0_10 = arith.constant 0 : index
    %10 = vector.load %arg4[%c0_8, %c0_9, %c0_10] : memref<1x256x32xf32, #tpu.memory_space<vmem>>, vector<1x256x32xf32>
    %11 = vector.shape_cast %10 : vector<1x256x32xf32> to vector<256x32xf32>
    %c0_11 = arith.constant 0 : index
    %c0_12 = arith.constant 0 : index
    %12 = vector.load %arg5[%c0_11, %c0_12] : memref<32x128xf32, #tpu.memory_space<vmem>>, vector<32x128xf32>
    %cst = arith.constant dense<0.000000e+00> : vector<256x128xf32>
    %13 = tpu.matmul %11, %12, %cst {dimension_numbers = #tpu.dot_dimension_numbers<[1], [0], [0], [1], [0, 0, 1, 1], [], []>} : vector<256x32xf32>, vector<32x128xf32>, vector<256x128xf32> -> vector<256x128xf32>
    %cst_13 = arith.constant dense<0.000000e+00> : vector<256x128xf32>
    %14 = tpu.matmul %6, %13, %cst_13 {dimension_numbers = #tpu.dot_dimension_numbers<[1], [0], [0], [1], [0, 0, 1, 1], [], []>} : vector<256x256xf32>, vector<256x128xf32>, vector<256x128xf32> -> vector<256x128xf32>
    %c0_14 = arith.constant 0 : index
    %c0_15 = arith.constant 0 : index
    %c0_16 = arith.constant 0 : index
    %15 = vector.load %arg7[%c0_14, %c0_15, %c0_16] : memref<1x256x128xf32, #tpu.memory_space<vmem>>, vector<1x256x128xf32>
    %16 = vector.shape_cast %15 : vector<1x256x128xf32> to vector<256x128xf32>
    %17 = vector.shape_cast %14 : vector<256x128xf32> to vector<1x256x128xf32>
    tpu.vector_store %arg7[%c0_14, %c0_15, %c0_16], %17 {strides = array<i32>} : memref<1x256x128xf32, #tpu.memory_space<vmem>>, vector<1x256x128xf32>,
    return
  }
  func.func @transform_0(%arg0: i32, %arg1: i32) -> (i32, i32, i32) {
    %c0_i32 = arith.constant 0 : i32
    %c0_i32_0 = arith.constant 0 : i32
    return %arg1, %arg0, %c0_i32 : i32, i32, i32
  }
  func.func @transform_1(%arg0: i32, %arg1: i32) -> (i32, i32) {
    %c0_i32 = arith.constant 0 : i32
    %c0_i32_0 = arith.constant 0 : i32
    return %arg0, %c0_i32 : i32, i32
  }
  func.func @transform_2(%arg0: i32, %arg1: i32) -> (i32, i32, i32) {
    %c0_i32 = arith.constant 0 : i32
    %c0_i32_0 = arith.constant 0 : i32
    %c0_i32_1 = arith.constant 0 : i32
    return %arg1, %c0_i32, %c0_i32_0 : i32, i32, i32
  }
  func.func @transform_3(%arg0: i32, %arg1: i32) -> (i32, i32) {
    %c0_i32 = arith.constant 0 : i32
    %c0_i32_0 = arith.constant 0 : i32
    %c0_i32_1 = arith.constant 0 : i32
    return %c0_i32, %c0_i32_0 : i32, i32
  }
  func.func @transform_4(%arg0: i32, %arg1: i32) -> (i32, i32, i32) {
    %c0_i32 = arith.constant 0 : i32
    %c0_i32_0 = arith.constant 0 : i32
    return %arg1, %arg0, %c0_i32 : i32, i32, i32
  }
  func.func @transform_5(%arg0: i32, %arg1: i32) -> (i32, i32, i32) {
    %c0_i32 = arith.constant 0 : i32
    %c0_i32_0 = arith.constant 0 : i32
    return %arg1, %arg0, %c0_i32 : i32, i32, i32
  }
}

</mosaic_0001>

<llo_original>
// kernel: tpu_custom_call.1
$region0: #{tpu_custom_call.1}
  #allocation0 [shape = 'u32[]', space=smem, size = 0x4, offset = 0x4, fixed_abs, tag = 'smem constant byte address 0x4 - core index']
  #allocation1 [shape = 'u32[72,128]{1,0:T(1,128)}', space=vmem, size = 0x9000, scoped, tag = 'internal scratch']
  #allocation2 [shape = 'f32[256,256]{1,0:T(8,128)}', space=vmem, size = 0x40000, scoped, tag = 'scratch operand']
  %s0 = inlined_call_operand.hbm [shape: f32[2,256,256], index: 0, kind: input, shape index: {}]
  %s1 = inlined_call_operand.vmem [shape: f32[256,256], index: 1, kind: input, shape index: {}]
  %s2 = inlined_call_operand.vmem [shape: f32[2,256,32], index: 2, kind: input, shape index: {}]
  %s3 = inlined_call_operand.vmem [shape: f32[32,128], index: 3, kind: input, shape index: {}]
  %s4 = inlined_call_operand.hbm [shape: f32[2,256,256], index: 4, kind: output, shape index: {0}]
  %s5 = inlined_call_operand.hbm [shape: f32[2,256,128], index: 5, kind: output, shape index: {1}]
  %6 = xla_tuple %s4, %s5
  %s7 = sld [smem:[#allocation0]]
  $region65: #{tpu_custom_call.1} parent=0
    _
  %s9 = ssub.s32 1, %s7
  %s10 = scalar_select 0, %s9, %s7
  $region1: #{tpu_custom_call.1} parent=0
    #allocation3 [shape = 'u8[524288]{0}', space=vmem, size = 0x80000, scoped, tag = 'input window, operand 0']
    #allocation4 [shape = 's32[2]{0}', space=sflag, size = 0x8, scoped, tag = 'scoped memory for tpu_custom_call.1']
    #allocation5 [shape = 's32[2]{0}', space=sflag, size = 0x8, scoped, tag = 'scoped memory for tpu_custom_call.1']
    #allocation6 [shape = 'u8[524288]{0}', space=vmem, size = 0x80000, scoped, tag = 'output window, operand 0']
    #allocation7 [shape = 'u8[262144]{0}', space=vmem, size = 0x40000, scoped, tag = 'output window, operand 1']
    #allocation8 [shape = 's32[2]{0}', space=sflag, size = 0x8, scoped, tag = 'scoped memory for tpu_custom_call.1']
    %11 = vsyncpa [#allocation4], 0
    %s12 = scalar_lea.sflag [#allocation4], 1
    %13 = vsyncpa %s12, 0
    %14 = vsyncpa [#allocation5], 0
    %s15 = scalar_lea.sflag [#allocation5], 1
    %16 = vsyncpa %s15, 0
    %17 = vsyncpa [#allocation8], 0
    %s18 = scalar_lea.sflag [#allocation8], 1
    %19 = vsyncpa %s18, 0
    loop: start=0, step=1, limit=4
    $region2: #{tpu_custom_call.1} parent=1 // loop_pre_header
      _
    $region3: #{tpu_custom_call.1} parent=1 // loop_header
      %s21 = sphi 0, %s25
      %p22 = scmp.ge.s32.totalorder %s21, 4
      %s28 = sphi 0, %s40
      %s29 = sphi 0, %s36
      %s30 = sphi 0, %s28
      %s31 = sphi 0, %s29
      %s32 = sphi 0, %s30
      %s33 = sphi 0, %s31
      %s45 = sphi 0, %s47
      %s48 = sphi 0, %s45
      %s49 = sphi 0, %s48
      %s65 = sphi 0, %s49
      %s71 = sphi 0, %s73
      %s74 = sphi 0, %s71
      %s75 = sphi 0, %s74
      %s91 = sphi 0, %s75
      %s97 = sphi 0, %s99
      %s100 = sphi 0, %s97
      %s101 = sphi 0, %s100
      %s117 = sphi 0, %s101
      %s121 = sphi 0, %s121
      %s123 = sphi 0, %s121
      %s124 = sphi 0, %s123
      %s138 = sphi 0, %s124
      %s146 = sphi 0, %s148
      %s149 = sphi 0, %s146
      %s150 = sphi 0, %s149
      %s166 = sphi 0, %s150
      %s174 = sphi 0, %s176
      %s177 = sphi 0, %s174
      %s178 = sphi 0, %s177
      %s194 = sphi 0, %s178
    $region4: #{tpu_custom_call.1} parent=1 // loop_header_branch
      %24 = sbr.rel (%p22) target = $region8
    $region5: #{tpu_custom_call.1} parent=1 // loop_body
      %s26 = ssub.s32 %s21, 1
      %s27 = ssub.s32 %s21, 2
      %s34 = sadd.s32 1, %s29
      %p35 = scmp.ge.s32.totalorder %s34, 2
      %s36 = scalar_select %p35, 0, %s34
      %s37 = sadd.s32 1, %s28
      %s38 = scalar_select %p35, %s37, %s28
      %p39 = scmp.ge.s32.totalorder %s38, 1
      %s40 = scalar_select %p39, 0, %s38
      %s41 = ssub.s32 %s29, %s36
      %s42 = ssub.s32 %s28, %s40
      %s43 = sor.u32 %s41, %s42
      %p44 = scmp.eq.s32.totalorder %s43, 0
      %s46 = sadd.s32 %s45, 1
      %s47 = scalar_select %p44, %s45, %s46
      %p50 = pneg %p44
      %p51 = scmp.eq.s32.totalorder %s21, 1
      %p52 = por %p50, %p51
      %p53 = scmp.ne.s32.totalorder %s45, %s48
      %p54 = scmp.eq.s32.totalorder %s21, 0
      %p55 = por %p53, %p54
      %p56 = scmp.ne.s32.totalorder %s45, %s48
      %p57 = scmp.eq.s32.totalorder %s26, 1
      %p58 = por %p56, %p57
      %p59 = scmp.ne.s32.totalorder %s48, %s49
      %p60 = scmp.eq.s32.totalorder %s26, 0
      %p61 = por %p59, %p60
      %p62 = scmp.ne.s32.totalorder %s48, %s49
      %p63 = scmp.eq.s32.totalorder %s27, 1
      %p64 = por %p62, %p63
      %p66 = scmp.ne.s32.totalorder %s49, %s65
      %p67 = scmp.eq.s32.totalorder %s27, 0
      %p68 = por %p66, %p67
      %s69 = ssub.s32 %s28, %s40
      %p70 = scmp.eq.s32.totalorder %s69, 0
      %s72 = sadd.s32 %s71, 1
      %s73 = scalar_select %p70, %s71, %s72
      %p76 = pneg %p70
      %p77 = scmp.eq.s32.totalorder %s21, 1
      %p78 = por %p76, %p77
      %p79 = scmp.ne.s32.totalorder %s71, %s74
      %p80 = scmp.eq.s32.totalorder %s21, 0
      %p81 = por %p79, %p80
      %p82 = scmp.ne.s32.totalorder %s71, %s74
      %p83 = scmp.eq.s32.totalorder %s26, 1
      %p84 = por %p82, %p83
      %p85 = scmp.ne.s32.totalorder %s74, %s75
      %p86 = scmp.eq.s32.totalorder %s26, 0
      %p87 = por %p85, %p86
      %p88 = scmp.ne.s32.totalorder %s74, %s75
      %p89 = scmp.eq.s32.totalorder %s27, 1
      %p90 = por %p88, %p89
      %p92 = scmp.ne.s32.totalorder %s75, %s91
      %p93 = scmp.eq.s32.totalorder %s27, 0
      %p94 = por %p92, %p93
      %s95 = ssub.s32 %s29, %s36
      %p96 = scmp.eq.s32.totalorder %s95, 0
      %s98 = sadd.s32 %s97, 1
      %s99 = scalar_select %p96, %s97, %s98
      %p102 = pneg %p96
      %p103 = scmp.eq.s32.totalorder %s21, 1
      %p104 = por %p102, %p103
      %p105 = scmp.ne.s32.totalorder %s97, %s100
      %p106 = scmp.eq.s32.totalorder %s21, 0
      %p107 = por %p105, %p106
      %p108 = scmp.ne.s32.totalorder %s97, %s100
      %p109 = scmp.eq.s32.totalorder %s26, 1
      %p110 = por %p108, %p109
      %p111 = scmp.ne.s32.totalorder %s100, %s101
      %p112 = scmp.eq.s32.totalorder %s26, 0
      %p113 = por %p111, %p112
      %p114 = scmp.ne.s32.totalorder %s100, %s101
      %p115 = scmp.eq.s32.totalorder %s27, 1
      %p116 = por %p114, %p115
      %p118 = scmp.ne.s32.totalorder %s101, %s117
      %p119 = scmp.eq.s32.totalorder %s27, 0
      %p120 = por %p118, %p119
      %s122 = sadd.s32 %s121, 1
      %p125 = scmp.eq.s32.totalorder %s21, 1
      %p126 = scmp.ne.s32.totalorder %s121, %s123
      %p127 = scmp.eq.s32.totalorder %s21, 0
      %p128 = por %p126, %p127
      %p129 = scmp.ne.s32.totalorder %s121, %s123
      %p130 = scmp.eq.s32.totalorder %s26, 1
      %p131 = por %p129, %p130
      %p132 = scmp.ne.s32.totalorder %s123, %s124
      %p133 = scmp.eq.s32.totalorder %s26, 0
      %p134 = por %p132, %p133
      %p135 = scmp.ne.s32.totalorder %s123, %s124
      %p136 = scmp.eq.s32.totalorder %s27, 1
      %p137 = por %p135, %p136
      %p139 = scmp.ne.s32.totalorder %s124, %s138
      %p140 = scmp.eq.s32.totalorder %s27, 0
      %p141 = por %p139, %p140
      %s142 = ssub.s32 %s29, %s36
      %s143 = ssub.s32 %s28, %s40
      %s144 = sor.u32 %s142, %s143
      %p145 = scmp.eq.s32.totalorder %s144, 0
      %s147 = sadd.s32 %s146, 1
      %s148 = scalar_select %p145, %s146, %s147
      %p151 = pneg %p145
      %p152 = scmp.eq.s32.totalorder %s21, 1
      %p153 = por %p151, %p152
      %p154 = scmp.ne.s32.totalorder %s146, %s149
      %p155 = scmp.eq.s32.totalorder %s21, 0
      %p156 = por %p154, %p155
      %p157 = scmp.ne.s32.totalorder %s146, %s149
      %p158 = scmp.eq.s32.totalorder %s26, 1
      %p159 = por %p157, %p158
      %p160 = scmp.ne.s32.totalorder %s149, %s150
      %p161 = scmp.eq.s32.totalorder %s26, 0
      %p162 = por %p160, %p161
      %p163 = scmp.ne.s32.totalorder %s149, %s150
      %p164 = scmp.eq.s32.totalorder %s27, 1
      %p165 = por %p163, %p164
      %p167 = scmp.ne.s32.totalorder %s150, %s166
      %p168 = scmp.eq.s32.totalorder %s27, 0
      %p169 = por %p167, %p168
      %s170 = ssub.s32 %s29, %s36
      %s171 = ssub.s32 %s28, %s40
      %s172 = sor.u32 %s170, %s171
      %p173 = scmp.eq.s32.totalorder %s172, 0
      %s175 = sadd.s32 %s174, 1
      %s176 = scalar_select %p173, %s174, %s175
      %p179 = pneg %p173
      %p180 = scmp.eq.s32.totalorder %s21, 1
      %p181 = por %p179, %p180
      %p182 = scmp.ne.s32.totalorder %s174, %s177
      %p183 = scmp.eq.s32.totalorder %s21, 0
      %p184 = por %p182, %p183
      %p185 = scmp.ne.s32.totalorder %s174, %s177
      %p186 = scmp.eq.s32.totalorder %s26, 1
      %p187 = por %p185, %p186
      %p188 = scmp.ne.s32.totalorder %s177, %s178
      %p189 = scmp.eq.s32.totalorder %s26, 0
      %p190 = por %p188, %p189
      %p191 = scmp.ne.s32.totalorder %s177, %s178
      %p192 = scmp.eq.s32.totalorder %s27, 1
      %p193 = por %p191, %p192
      %p195 = scmp.ne.s32.totalorder %s178, %s194
      %p196 = scmp.eq.s32.totalorder %s27, 0
      %p197 = por %p195, %p196
      %p198 = scmp.le.s32.totalorder 1, %s21
      %p199 = scmp.lt.s32.totalorder %s21, 3
      %p200 = pnand %p198, %p199
      %p201 = pneg %p200
      // Predicated region
      $region9: #{tpu_custom_call.1} parent=5 // pred_check
        _
      $region10: #{tpu_custom_call.1} parent=5 // pred_check_branch
        %203 = sbr.rel (%p200) target = $region12
      $region11: #{tpu_custom_call.1} parent=5 // pred_region
        %s204 = ssub.s32 %s21, 1
        // Predicated region
        $region13: #{tpu_custom_call.1} parent=11 // pred_check
          %p205 = pneg %p87
        $region14: #{tpu_custom_call.1} parent=11 // pred_check_branch
          %207 = sbr.rel (%p205) target = $region16
        $region15: #{tpu_custom_call.1} parent=11 // pred_region
          %s208 = smul.u32 32, %s30
          %p209 = scmp.lt.s32.totalorder %s208, 31
          %s210 = scalar_select %p209, %s208, 31
          %s211 = smul.addr %s210, 2
          %s212 = smul.addr %s211, 8
          %s213 = scalar_lea.vmem %s1, %s212
          %s214 = smul.u32 32, %s30
        $region16: #{tpu_custom_call.1} parent=11 // pred_fallthru
          _
        // Predicated region
        $region17: #{tpu_custom_call.1} parent=11 // pred_check
          %p215 = pneg %p134
        $region18: #{tpu_custom_call.1} parent=11 // pred_check_branch
          %217 = sbr.rel (%p215) target = $region20
        $region19: #{tpu_custom_call.1} parent=11 // pred_region
          _
        $region20: #{tpu_custom_call.1} parent=11 // pred_fallthru
          _
      $region12: #{tpu_custom_call.1} parent=5 // pred_fallthru
        _
      %p218 = scmp.lt.s32.totalorder %s21, 2
      // Predicated region
      $region21: #{tpu_custom_call.1} parent=5 // pred_check
        %p219 = pneg %p218
      $region22: #{tpu_custom_call.1} parent=5 // pred_check_branch
        %221 = sbr.rel (%p219) target = $region24
      $region23: #{tpu_custom_call.1} parent=5 // pred_region
        // Predicated region
        $region25: #{tpu_custom_call.1} parent=23 // pred_check
          %p222 = pneg %p55
        $region26: #{tpu_custom_call.1} parent=23 // pred_check_branch
          %224 = sbr.rel (%p222) target = $region28
        $region27: #{tpu_custom_call.1} parent=23 // pred_region
          %s225 = sand.u32 %s45, 1
          %s226 = scalar_lea.sflag [#allocation4], %s225
          %s227 = sand.u32 %s45, 1
          %s228 = smul.addr %s227, 512
          %s229 = scalar_lea.vmem [#allocation3], %s228
          %s230 = smul.u32 32, %s28
          %232 = vsyncadd %s226, 0
          %s233 = smul.addr %s230, 2
          %s234 = smul.addr %s29, 64
          %s235 = sadd.s32 %s233, %s234
          %s236 = smul.addr %s235, 8
          %s237 = scalar_lea.hbm %s0, %s236
          %s238 = sshll.u32 %s237, 4
          %s239 = int_to_ptr.hbm [resolvable:$true] %s238
          %s240 = sshll.u32 %s229, 4
          %s241 = int_to_ptr.vmem [resolvable:$true] %s240
          %246 = dma.hbm_to_vmem [thread:$0]  %s239, 8192, %s241, %s226, 256, 256, 16
        $region28: #{tpu_custom_call.1} parent=23 // pred_fallthru
          _
        // Predicated region
        $region29: #{tpu_custom_call.1} parent=23 // pred_check
          %p247 = pneg %p107
        $region30: #{tpu_custom_call.1} parent=23 // pred_check_branch
          %249 = sbr.rel (%p247) target = $region32
        $region31: #{tpu_custom_call.1} parent=23 // pred_region
          %p250 = scmp.lt.s32.totalorder %s29, 1
          %s251 = scalar_select %p250, %s29, 1
          %s252 = smul.addr %s251, 32
          %s253 = smul.addr %s252, 8
          %s254 = scalar_lea.vmem %s2, %s253
        $region32: #{tpu_custom_call.1} parent=23 // pred_fallthru
          _
      $region24: #{tpu_custom_call.1} parent=5 // pred_fallthru
        _
      %p255 = scmp.le.s32.totalorder 1, %s21
      %p256 = scmp.lt.s32.totalorder %s21, 3
      %p257 = pnand %p255, %p256
      %p258 = pneg %p257
      // Predicated region
      $region33: #{tpu_custom_call.1} parent=5 // pred_check
        _
      $region34: #{tpu_custom_call.1} parent=5 // pred_check_branch
        %260 = sbr.rel (%p257) target = $region36
      $region35: #{tpu_custom_call.1} parent=5 // pred_region
        %s261 = ssub.s32 %s21, 1
        %s262 = sand.u32 %s48, 1
        %s263 = scalar_lea.sflag [#allocation4], %s262
        %s264 = sand.u32 %s48, 1
        %s265 = smul.addr %s264, 512
        %s266 = scalar_lea.vmem [#allocation3], %s265
        // Predicated region
        $region37: #{tpu_custom_call.1} parent=35 // pred_check
          %p267 = pneg %p61
        $region38: #{tpu_custom_call.1} parent=35 // pred_check_branch
          %269 = sbr.rel (%p267) target = $region40
        $region39: #{tpu_custom_call.1} parent=35 // pred_region
          %271 = dma.done %s263, 8192
        $region40: #{tpu_custom_call.1} parent=35 // pred_fallthru
          _
        %s272 = sand.u32 %s48, 1
        %s273 = scalar_lea.sflag [#allocation4], %s272
        %s274 = sand.u32 %s48, 1
        %s275 = smul.addr %s274, 512
        %s276 = scalar_lea.vmem [#allocation3], %s275
        %p277 = pneg %p61
        %p278 = pneg %p58
        %s279 = smul.u32 32, %s30
        %p280 = scmp.lt.s32.totalorder %s279, 31
        %s281 = scalar_select %p280, %s279, 31
        %s282 = smul.addr %s281, 2
        %s283 = smul.addr %s282, 8
        %s284 = scalar_lea.vmem %s1, %s283
        %p285 = pneg %p87
        %p286 = pneg %p84
        %p287 = scmp.lt.s32.totalorder %s31, 1
        %s288 = scalar_select %p287, %s31, 1
        %s289 = smul.addr %s288, 32
        %s290 = smul.addr %s289, 8
        %s291 = scalar_lea.vmem %s2, %s290
        %p292 = pneg %p113
        %p293 = pneg %p110
        %p294 = pneg %p134
        %p295 = pneg %p131
        %p296 = pneg %p162
        %p297 = pneg %p159
        %s298 = sand.u32 %s149, 1
        %s299 = scalar_lea.sflag [#allocation5], %s298
        %s300 = sand.u32 %s149, 1
        %s301 = smul.addr %s300, 512
        %s302 = scalar_lea.vmem [#allocation6], %s301
        %p303 = pneg %p190
        %p304 = pneg %p187
        %s305 = sand.u32 %s177, 1
        %s306 = scalar_lea.sflag [#allocation8], %s305
        %s307 = sand.u32 %s177, 1
        %s308 = smul.addr %s307, 256
        %s309 = scalar_lea.vmem [#allocation7], %s308
        %s310 = smul.u32 32, %s30
        %s311 = smul.u32 32, %s30
        %p312 = scmp.lt.s32.totalorder %s311, 31
        %s313 = scalar_select %p312, %s311, 31
        %s314 = smul.addr %s313, 2
        %s315 = smul.addr %s314, 8
        %s316 = scalar_lea.vmem %s1, %s315
        %s317 = smul.u32 32, %s30
        %p318 = scmp.lt.s32.totalorder %s31, 1
        %s319 = scalar_select %p318, %s31, 1
        %s320 = smul.addr %s319, 32
        %s321 = smul.addr %s320, 8
        %s322 = scalar_lea.vmem %s2, %s321
        %s323 = smul.u32 32, %s30
        %s324 = smul.u32 32, %s30
        %p325 = scmp.eq.s32.totalorder %s31, 0
        // Predicated region
        $region41: #{tpu_custom_call.1} parent=35 // pred_check
          %p326 = pneg %p325
        $region42: #{tpu_custom_call.1} parent=35 // pred_check_branch
          %328 = sbr.rel (%p326) target = $region44
        $region43: #{tpu_custom_call.1} parent=35 // pred_region
          %v329 = vld [vmem:[%s316] sm:$0xff]
          %v330 = vld [vmem:[%s316 + $0x8] sm:$0xff]
          %v331 = vld [vmem:[%s316 + $0x10] sm:$0xff]
          %v332 = vld [vmem:[%s316 + $0x18] sm:$0xff]
          %v333 = vld [vmem:[%s316 + $0x20] sm:$0xff]
          %v334 = vld [vmem:[%s316 + $0x28] sm:$0xff]
          %v335 = vld [vmem:[%s316 + $0x30] sm:$0xff]
          %v336 = vld [vmem:[%s316 + $0x38] sm:$0xff]
          %v337 = vld [vmem:[%s316 + $0x40] sm:$0xff]
          %v338 = vld [vmem:[%s316 + $0x48] sm:$0xff]
          %v339 = vld [vmem:[%s316 + $0x50] sm:$0xff]
          %v340 = vld [vmem:[%s316 + $0x58] sm:$0xff]
          %v341 = vld [vmem:[%s316 + $0x60] sm:$0xff]
          %v342 = vld [vmem:[%s316 + $0x68] sm:$0xff]
          %v343 = vld [vmem:[%s316 + $0x70] sm:$0xff]
          %v344 = vld [vmem:[%s316 + $0x78] sm:$0xff]
          %v345 = vld [vmem:[%s316 + $0x80] sm:$0xff]
          %v346 = vld [vmem:[%s316 + $0x88] sm:$0xff]
          %v347 = vld [vmem:[%s316 + $0x90] sm:$0xff]
          %v348 = vld [vmem:[%s316 + $0x98] sm:$0xff]
          %v349 = vld [vmem:[%s316 + $0xa0] sm:$0xff]
          %v350 = vld [vmem:[%s316 + $0xa8] sm:$0xff]
          %v351 = vld [vmem:[%s316 + $0xb0] sm:$0xff]
          %v352 = vld [vmem:[%s316 + $0xb8] sm:$0xff]
          %v353 = vld [vmem:[%s316 + $0xc0] sm:$0xff]
          %v354 = vld [vmem:[%s316 + $0xc8] sm:$0xff]
          %v355 = vld [vmem:[%s316 + $0xd0] sm:$0xff]
          %v356 = vld [vmem:[%s316 + $0xd8] sm:$0xff]
          %v357 = vld [vmem:[%s316 + $0xe0] sm:$0xff]
          %v358 = vld [vmem:[%s316 + $0xe8] sm:$0xff]
          %v359 = vld [vmem:[%s316 + $0xf0] sm:$0xff]
          %v360 = vld [vmem:[%s316 + $0xf8] sm:$0xff]
          %v361 = vld [vmem:[%s316 + $0x100] sm:$0xff]
          %v362 = vld [vmem:[%s316 + $0x108] sm:$0xff]
          %v363 = vld [vmem:[%s316 + $0x110] sm:$0xff]
          %v364 = vld [vmem:[%s316 + $0x118] sm:$0xff]
          %v365 = vld [vmem:[%s316 + $0x120] sm:$0xff]
          %v366 = vld [vmem:[%s316 + $0x128] sm:$0xff]
          %v367 = vld [vmem:[%s316 + $0x130] sm:$0xff]
          %v368 = vld [vmem:[%s316 + $0x138] sm:$0xff]
          %v369 = vld [vmem:[%s316 + $0x140] sm:$0xff]
          %v370 = vld [vmem:[%s316 + $0x148] sm:$0xff]
          %v371 = vld [vmem:[%s316 + $0x150] sm:$0xff]
          %v372 = vld [vmem:[%s316 + $0x158] sm:$0xff]
          %v373 = vld [vmem:[%s316 + $0x160] sm:$0xff]
          %v374 = vld [vmem:[%s316 + $0x168] sm:$0xff]
          %v375 = vld [vmem:[%s316 + $0x170] sm:$0xff]
          %v376 = vld [vmem:[%s316 + $0x178] sm:$0xff]
          %v377 = vld [vmem:[%s316 + $0x180] sm:$0xff]
          %v378 = vld [vmem:[%s316 + $0x188] sm:$0xff]
          %v379 = vld [vmem:[%s316 + $0x190] sm:$0xff]
          %v380 = vld [vmem:[%s316 + $0x198] sm:$0xff]
          %v381 = vld [vmem:[%s316 + $0x1a0] sm:$0xff]
          %v382 = vld [vmem:[%s316 + $0x1a8] sm:$0xff]
          %v383 = vld [vmem:[%s316 + $0x1b0] sm:$0xff]
          %v384 = vld [vmem:[%s316 + $0x1b8] sm:$0xff]
          %v385 = vld [vmem:[%s316 + $0x1c0] sm:$0xff]
          %v386 = vld [vmem:[%s316 + $0x1c8] sm:$0xff]
          %v387 = vld [vmem:[%s316 + $0x1d0] sm:$0xff]
          %v388 = vld [vmem:[%s316 + $0x1d8] sm:$0xff]
          %v389 = vld [vmem:[%s316 + $0x1e0] sm:$0xff]
          %v390 = vld [vmem:[%s316 + $0x1e8] sm:$0xff]
          %v391 = vld [vmem:[%s316 + $0x1f0] sm:$0xff]
          %v392 = vld [vmem:[%s316 + $0x1f8] sm:$0xff]
          %v393 = vxor.u32 %v329, 2147483648
          %v394 = vxor.u32 %v330, 2147483648
          %v395 = vxor.u32 %v331, 2147483648
          %v396 = vxor.u32 %v332, 2147483648
          %v397 = vxor.u32 %v333, 2147483648
          %v398 = vxor.u32 %v334, 2147483648
          %v399 = vxor.u32 %v335, 2147483648
          %v400 = vxor.u32 %v336, 2147483648
          %v401 = vxor.u32 %v337, 2147483648
          %v402 = vxor.u32 %v338, 2147483648
          %v403 = vxor.u32 %v339, 2147483648
          %v404 = vxor.u32 %v340, 2147483648
          %v405 = vxor.u32 %v341, 2147483648
          %v406 = vxor.u32 %v342, 2147483648
          %v407 = vxor.u32 %v343, 2147483648
          %v408 = vxor.u32 %v344, 2147483648
          %v409 = vxor.u32 %v345, 2147483648
          %v410 = vxor.u32 %v346, 2147483648
          %v411 = vxor.u32 %v347, 2147483648
          %v412 = vxor.u32 %v348, 2147483648
          %v413 = vxor.u32 %v349, 2147483648
          %v414 = vxor.u32 %v350, 2147483648
          %v415 = vxor.u32 %v351, 2147483648
          %v416 = vxor.u32 %v352, 2147483648
          %v417 = vxor.u32 %v353, 2147483648
          %v418 = vxor.u32 %v354, 2147483648
          %v419 = vxor.u32 %v355, 2147483648
          %v420 = vxor.u32 %v356, 2147483648
          %v421 = vxor.u32 %v357, 2147483648
          %v422 = vxor.u32 %v358, 2147483648
          %v423 = vxor.u32 %v359, 2147483648
          %v424 = vxor.u32 %v360, 2147483648
          %v425 = vxor.u32 %v361, 2147483648
          %v426 = vxor.u32 %v362, 2147483648
          %v427 = vxor.u32 %v363, 2147483648
          %v428 = vxor.u32 %v364, 2147483648
          %v429 = vxor.u32 %v365, 2147483648
          %v430 = vxor.u32 %v366, 2147483648
          %v431 = vxor.u32 %v367, 2147483648
          %v432 = vxor.u32 %v368, 2147483648
          %v433 = vxor.u32 %v369, 2147483648
          %v434 = vxor.u32 %v370, 2147483648
          %v435 = vxor.u32 %v371, 2147483648
          %v436 = vxor.u32 %v372, 2147483648
          %v437 = vxor.u32 %v373, 2147483648
          %v438 = vxor.u32 %v374, 2147483648
          %v439 = vxor.u32 %v375, 2147483648
          %v440 = vxor.u32 %v376, 2147483648
          %v441 = vxor.u32 %v377, 2147483648
          %v442 = vxor.u32 %v378, 2147483648
          %v443 = vxor.u32 %v379, 2147483648
          %v444 = vxor.u32 %v380, 2147483648
          %v445 = vxor.u32 %v381, 2147483648
          %v446 = vxor.u32 %v382, 2147483648
          %v447 = vxor.u32 %v383, 2147483648
          %v448 = vxor.u32 %v384, 2147483648
          %v449 = vxor.u32 %v385, 2147483648
          %v450 = vxor.u32 %v386, 2147483648
          %v451 = vxor.u32 %v387, 2147483648
          %v452 = vxor.u32 %v388, 2147483648
          %v453 = vxor.u32 %v389, 2147483648
          %v454 = vxor.u32 %v390, 2147483648
          %v455 = vxor.u32 %v391, 2147483648
          %v456 = vxor.u32 %v392, 2147483648
          %v457 = vmul.f32 %v393, 1.442695
          %v458 = vpow.pop %v457
          %v459 = vmul.f32 %v394, 1.442695
          %v460 = vpow.pop %v459
          %v461 = vmul.f32 %v395, 1.442695
          %v462 = vpow.pop %v461
          %v463 = vmul.f32 %v396, 1.442695
          %v464 = vpow.pop %v463
          %v465 = vmul.f32 %v397, 1.442695
          %v466 = vpow.pop %v465
          %v467 = vmul.f32 %v398, 1.442695
          %v468 = vpow.pop %v467
          %v469 = vmul.f32 %v399, 1.442695
          %v470 = vpow.pop %v469
          %v471 = vmul.f32 %v400, 1.442695
          %v472 = vpow.pop %v471
          %v473 = vmul.f32 %v401, 1.442695
          %v474 = vpow.pop %v473
          %v475 = vmul.f32 %v402, 1.442695
          %v476 = vpow.pop %v475
          %v477 = vmul.f32 %v403, 1.442695
          %v478 = vpow.pop %v477
          %v479 = vmul.f32 %v404, 1.442695
          %v480 = vpow.pop %v479
          %v481 = vmul.f32 %v405, 1.442695
          %v482 = vpow.pop %v481
          %v483 = vmul.f32 %v406, 1.442695
          %v484 = vpow.pop %v483
          %v485 = vmul.f32 %v407, 1.442695
          %v486 = vpow.pop %v485
          %v487 = vmul.f32 %v408, 1.442695
          %v488 = vpow.pop %v487
          %v489 = vmul.f32 %v409, 1.442695
          %v490 = vpow.pop %v489
          %v491 = vmul.f32 %v410, 1.442695
          %v492 = vpow.pop %v491
          %v493 = vmul.f32 %v411, 1.442695
          %v494 = vpow.pop %v493
          %v495 = vmul.f32 %v412, 1.442695
          %v496 = vpow.pop %v495
          %v497 = vmul.f32 %v413, 1.442695
          %v498 = vpow.pop %v497
          %v499 = vmul.f32 %v414, 1.442695
          %v500 = vpow.pop %v499
          %v501 = vmul.f32 %v415, 1.442695
          %v502 = vpow.pop %v501
          %v503 = vmul.f32 %v416, 1.442695
          %v504 = vpow.pop %v503
          %v505 = vmul.f32 %v417, 1.442695
          %v506 = vpow.pop %v505
          %v507 = vmul.f32 %v418, 1.442695
          %v508 = vpow.pop %v507
          %v509 = vmul.f32 %v419, 1.442695
          %v510 = vpow.pop %v509
          %v511 = vmul.f32 %v420, 1.442695
          %v512 = vpow.pop %v511
          %v513 = vmul.f32 %v421, 1.442695
          %v514 = vpow.pop %v513
          %v515 = vmul.f32 %v422, 1.442695
          %v516 = vpow.pop %v515
          %v517 = vmul.f32 %v423, 1.442695
          %v518 = vpow.pop %v517
          %v519 = vmul.f32 %v424, 1.442695
          %v520 = vpow.pop %v519
          %v521 = vmul.f32 %v425, 1.442695
          %v522 = vpow.pop %v521
          %v523 = vmul.f32 %v426, 1.442695
          %v524 = vpow.pop %v523
          %v525 = vmul.f32 %v427, 1.442695
          %v526 = vpow.pop %v525
          %v527 = vmul.f32 %v428, 1.442695
          %v528 = vpow.pop %v527
          %v529 = vmul.f32 %v429, 1.442695
          %v530 = vpow.pop %v529
          %v531 = vmul.f32 %v430, 1.442695
          %v532 = vpow.pop %v531
          %v533 = vmul.f32 %v431, 1.442695
          %v534 = vpow.pop %v533
          %v535 = vmul.f32 %v432, 1.442695
          %v536 = vpow.pop %v535
          %v537 = vmul.f32 %v433, 1.442695
          %v538 = vpow.pop %v537
          %v539 = vmul.f32 %v434, 1.442695
          %v540 = vpow.pop %v539
          %v541 = vmul.f32 %v435, 1.442695
          %v542 = vpow.pop %v541
          %v543 = vmul.f32 %v436, 1.442695
          %v544 = vpow.pop %v543
          %v545 = vmul.f32 %v437, 1.442695
          %v546 = vpow.pop %v545
          %v547 = vmul.f32 %v438, 1.442695
          %v548 = vpow.pop %v547
          %v549 = vmul.f32 %v439, 1.442695
          %v550 = vpow.pop %v549
          %v551 = vmul.f32 %v440, 1.442695
          %v552 = vpow.pop %v551
          %v553 = vmul.f32 %v441, 1.442695
          %v554 = vpow.pop %v553
          %v555 = vmul.f32 %v442, 1.442695
          %v556 = vpow.pop %v555
          %v557 = vmul.f32 %v443, 1.442695
          %v558 = vpow.pop %v557
          %v559 = vmul.f32 %v444, 1.442695
          %v560 = vpow.pop %v559
          %v561 = vmul.f32 %v445, 1.442695
          %v562 = vpow.pop %v561
          %v563 = vmul.f32 %v446, 1.442695
          %v564 = vpow.pop %v563
          %v565 = vmul.f32 %v447, 1.442695
          %v566 = vpow.pop %v565
          %v567 = vmul.f32 %v448, 1.442695
          %v568 = vpow.pop %v567
          %v569 = vmul.f32 %v449, 1.442695
          %v570 = vpow.pop %v569
          %v571 = vmul.f32 %v450, 1.442695
          %v572 = vpow.pop %v571
          %v573 = vmul.f32 %v451, 1.442695
          %v574 = vpow.pop %v573
          %v575 = vmul.f32 %v452, 1.442695
          %v576 = vpow.pop %v575
          %v577 = vmul.f32 %v453, 1.442695
          %v578 = vpow.pop %v577
          %v579 = vmul.f32 %v454, 1.442695
          %v580 = vpow.pop %v579
          %v581 = vmul.f32 %v455, 1.442695
          %v582 = vpow.pop %v581
          %v583 = vmul.f32 %v456, 1.442695
          %v584 = vpow.pop %v583
          %v585 = vadd.f32 %v458, 1.0
          %v586 = vadd.f32 %v460, 1.0
          %v587 = vadd.f32 %v462, 1.0
          %v588 = vadd.f32 %v464, 1.0
          %v589 = vadd.f32 %v466, 1.0
          %v590 = vadd.f32 %v468, 1.0
          %v591 = vadd.f32 %v470, 1.0
          %v592 = vadd.f32 %v472, 1.0
          %v593 = vadd.f32 %v474, 1.0
          %v594 = vadd.f32 %v476, 1.0
          %v595 = vadd.f32 %v478, 1.0
          %v596 = vadd.f32 %v480, 1.0
          %v597 = vadd.f32 %v482, 1.0
          %v598 = vadd.f32 %v484, 1.0
          %v599 = vadd.f32 %v486, 1.0
          %v600 = vadd.f32 %v488, 1.0
          %v601 = vadd.f32 %v490, 1.0
          %v602 = vadd.f32 %v492, 1.0
          %v603 = vadd.f32 %v494, 1.0
          %v604 = vadd.f32 %v496, 1.0
          %v605 = vadd.f32 %v498, 1.0
          %v606 = vadd.f32 %v500, 1.0
          %v607 = vadd.f32 %v502, 1.0
          %v608 = vadd.f32 %v504, 1.0
          %v609 = vadd.f32 %v506, 1.0
          %v610 = vadd.f32 %v508, 1.0
          %v611 = vadd.f32 %v510, 1.0
          %v612 = vadd.f32 %v512, 1.0
          %v613 = vadd.f32 %v514, 1.0
          %v614 = vadd.f32 %v516, 1.0
          %v615 = vadd.f32 %v518, 1.0
          %v616 = vadd.f32 %v520, 1.0
          %v617 = vadd.f32 %v522, 1.0
          %v618 = vadd.f32 %v524, 1.0
          %v619 = vadd.f32 %v526, 1.0
          %v620 = vadd.f32 %v528, 1.0
          %v621 = vadd.f32 %v530, 1.0
          %v622 = vadd.f32 %v532, 1.0
          %v623 = vadd.f32 %v534, 1.0
          %v624 = vadd.f32 %v536, 1.0
          %v625 = vadd.f32 %v538, 1.0
          %v626 = vadd.f32 %v540, 1.0
          %v627 = vadd.f32 %v542, 1.0
          %v628 = vadd.f32 %v544, 1.0
          %v629 = vadd.f32 %v546, 1.0
          %v630 = vadd.f32 %v548, 1.0
          %v631 = vadd.f32 %v550, 1.0
          %v632 = vadd.f32 %v552, 1.0
          %v633 = vadd.f32 %v554, 1.0
          %v634 = vadd.f32 %v556, 1.0
          %v635 = vadd.f32 %v558, 1.0
          %v636 = vadd.f32 %v560, 1.0
          %v637 = vadd.f32 %v562, 1.0
          %v638 = vadd.f32 %v564, 1.0
          %v639 = vadd.f32 %v566, 1.0
          %v640 = vadd.f32 %v568, 1.0
          %v641 = vadd.f32 %v570, 1.0
          %v642 = vadd.f32 %v572, 1.0
          %v643 = vadd.f32 %v574, 1.0
          %v644 = vadd.f32 %v576, 1.0
          %v645 = vadd.f32 %v578, 1.0
          %v646 = vadd.f32 %v580, 1.0
          %v647 = vadd.f32 %v582, 1.0
          %v648 = vadd.f32 %v584, 1.0
          %v649 = vrcp.pop %v585
          %v650 = vmul.f32 %v585, %v649
          %v651 = vsub.f32 1.0, %v650
          %v652 = vmul.f32 %v649, %v651
          %v653 = vadd.f32 %v649, %v652
          %vm654 = vweird.f32 %v585
          %vm655 = vweird.f32 %v649
          %vm656 = vmor %vm654, %vm655
          %v657 = vsel %vm656, %v649, %v653
          %v658 = vand.u32 2147483647, %v585
          %vm659 = vcmp.eq.f32.partialorder %v658, 8.507059e+37
          %v660 = vand.u32 %v585, 2147483648
          %v661 = vor.u32 1.1754944e-38, %v660
          %v662 = vsel %vm659, %v661, %v657
          %v663 = vmul.f32 1.0, %v662
          %v664 = vrcp.pop %v586
          %v665 = vmul.f32 %v586, %v664
          %v666 = vsub.f32 1.0, %v665
          %v667 = vmul.f32 %v664, %v666
          %v668 = vadd.f32 %v664, %v667
          %vm669 = vweird.f32 %v586
          %vm670 = vweird.f32 %v664
          %vm671 = vmor %vm669, %vm670
          %v672 = vsel %vm671, %v664, %v668
          %v673 = vand.u32 2147483647, %v586
          %vm674 = vcmp.eq.f32.partialorder %v673, 8.507059e+37
          %v675 = vand.u32 %v586, 2147483648
          %v676 = vor.u32 1.1754944e-38, %v675
          %v677 = vsel %vm674, %v676, %v672
          %v678 = vmul.f32 1.0, %v677
          %v679 = vrcp.pop %v587
          %v680 = vmul.f32 %v587, %v679
          %v681 = vsub.f32 1.0, %v680
          %v682 = vmul.f32 %v679, %v681
          %v683 = vadd.f32 %v679, %v682
          %vm684 = vweird.f32 %v587
          %vm685 = vweird.f32 %v679
          %vm686 = vmor %vm684, %vm685
          %v687 = vsel %vm686, %v679, %v683
          %v688 = vand.u32 2147483647, %v587
          %vm689 = vcmp.eq.f32.partialorder %v688, 8.507059e+37
          %v690 = vand.u32 %v587, 2147483648
          %v691 = vor.u32 1.1754944e-38, %v690
          %v692 = vsel %vm689, %v691, %v687
          %v693 = vmul.f32 1.0, %v692
          %v694 = vrcp.pop %v588
          %v695 = vmul.f32 %v588, %v694
          %v696 = vsub.f32 1.0, %v695
          %v697 = vmul.f32 %v694, %v696
          %v698 = vadd.f32 %v694, %v697
          %vm699 = vweird.f32 %v588
          %vm700 = vweird.f32 %v694
          %vm701 = vmor %vm699, %vm700
          %v702 = vsel %vm701, %v694, %v698
          %v703 = vand.u32 2147483647, %v588
          %vm704 = vcmp.eq.f32.partialorder %v703, 8.507059e+37
          %v705 = vand.u32 %v588, 2147483648
          %v706 = vor.u32 1.1754944e-38, %v705
          %v707 = vsel %vm704, %v706, %v702
          %v708 = vmul.f32 1.0, %v707
          %v709 = vrcp.pop %v589
          %v710 = vmul.f32 %v589, %v709
          %v711 = vsub.f32 1.0, %v710
          %v712 = vmul.f32 %v709, %v711
          %v713 = vadd.f32 %v709, %v712
          %vm714 = vweird.f32 %v589
          %vm715 = vweird.f32 %v709
          %vm716 = vmor %vm714, %vm715
          %v717 = vsel %vm716, %v709, %v713
          %v718 = vand.u32 2147483647, %v589
          %vm719 = vcmp.eq.f32.partialorder %v718, 8.507059e+37
          %v720 = vand.u32 %v589, 2147483648
          %v721 = vor.u32 1.1754944e-38, %v720
          %v722 = vsel %vm719, %v721, %v717
          %v723 = vmul.f32 1.0, %v722
          %v724 = vrcp.pop %v590
          %v725 = vmul.f32 %v590, %v724
          %v726 = vsub.f32 1.0, %v725
          %v727 = vmul.f32 %v724, %v726
          %v728 = vadd.f32 %v724, %v727
          %vm729 = vweird.f32 %v590
          %vm730 = vweird.f32 %v724
          %vm731 = vmor %vm729, %vm730
          %v732 = vsel %vm731, %v724, %v728
          %v733 = vand.u32 2147483647, %v590
          %vm734 = vcmp.eq.f32.partialorder %v733, 8.507059e+37
          %v735 = vand.u32 %v590, 2147483648
          %v736 = vor.u32 1.1754944e-38, %v735
          %v737 = vsel %vm734, %v736, %v732
          %v738 = vmul.f32 1.0, %v737
          %v739 = vrcp.pop %v591
          %v740 = vmul.f32 %v591, %v739
          %v741 = vsub.f32 1.0, %v740
          %v742 = vmul.f32 %v739, %v741
          %v743 = vadd.f32 %v739, %v742
          %vm744 = vweird.f32 %v591
          %vm745 = vweird.f32 %v739
          %vm746 = vmor %vm744, %vm745
          %v747 = vsel %vm746, %v739, %v743
          %v748 = vand.u32 2147483647, %v591
          %vm749 = vcmp.eq.f32.partialorder %v748, 8.507059e+37
          %v750 = vand.u32 %v591, 2147483648
          %v751 = vor.u32 1.1754944e-38, %v750
          %v752 = vsel %vm749, %v751, %v747
          %v753 = vmul.f32 1.0, %v752
          %v754 = vrcp.pop %v592
          %v755 = vmul.f32 %v592, %v754
          %v756 = vsub.f32 1.0, %v755
          %v757 = vmul.f32 %v754, %v756
          %v758 = vadd.f32 %v754, %v757
          %vm759 = vweird.f32 %v592
          %vm760 = vweird.f32 %v754
          %vm761 = vmor %vm759, %vm760
          %v762 = vsel %vm761, %v754, %v758
          %v763 = vand.u32 2147483647, %v592
          %vm764 = vcmp.eq.f32.partialorder %v763, 8.507059e+37
          %v765 = vand.u32 %v592, 2147483648
          %v766 = vor.u32 1.1754944e-38, %v765
          %v767 = vsel %vm764, %v766, %v762
          %v768 = vmul.f32 1.0, %v767
          %v769 = vrcp.pop %v593
          %v770 = vmul.f32 %v593, %v769
          %v771 = vsub.f32 1.0, %v770
          %v772 = vmul.f32 %v769, %v771
          %v773 = vadd.f32 %v769, %v772
          %vm774 = vweird.f32 %v593
          %vm775 = vweird.f32 %v769
          %vm776 = vmor %vm774, %vm775
          %v777 = vsel %vm776, %v769, %v773
          %v778 = vand.u32 2147483647, %v593
          %vm779 = vcmp.eq.f32.partialorder %v778, 8.507059e+37
          %v780 = vand.u32 %v593, 2147483648
          %v781 = vor.u32 1.1754944e-38, %v780
          %v782 = vsel %vm779, %v781, %v777
          %v783 = vmul.f32 1.0, %v782
          %v784 = vrcp.pop %v594
          %v785 = vmul.f32 %v594, %v784
          %v786 = vsub.f32 1.0, %v785
          %v787 = vmul.f32 %v784, %v786
          %v788 = vadd.f32 %v784, %v787
          %vm789 = vweird.f32 %v594
          %vm790 = vweird.f32 %v784
          %vm791 = vmor %vm789, %vm790
          %v792 = vsel %vm791, %v784, %v788
          %v793 = vand.u32 2147483647, %v594
          %vm794 = vcmp.eq.f32.partialorder %v793, 8.507059e+37
          %v795 = vand.u32 %v594, 2147483648
          %v796 = vor.u32 1.1754944e-38, %v795
          %v797 = vsel %vm794, %v796, %v792
          %v798 = vmul.f32 1.0, %v797
          %v799 = vrcp.pop %v595
          %v800 = vmul.f32 %v595, %v799
          %v801 = vsub.f32 1.0, %v800
          %v802 = vmul.f32 %v799, %v801
          %v803 = vadd.f32 %v799, %v802
          %vm804 = vweird.f32 %v595
          %vm805 = vweird.f32 %v799
          %vm806 = vmor %vm804, %vm805
          %v807 = vsel %vm806, %v799, %v803
          %v808 = vand.u32 2147483647, %v595
          %vm809 = vcmp.eq.f32.partialorder %v808, 8.507059e+37
          %v810 = vand.u32 %v595, 2147483648
          %v811 = vor.u32 1.1754944e-38, %v810
          %v812 = vsel %vm809, %v811, %v807
          %v813 = vmul.f32 1.0, %v812
          %v814 = vrcp.pop %v596
          %v815 = vmul.f32 %v596, %v814
          %v816 = vsub.f32 1.0, %v815
          %v817 = vmul.f32 %v814, %v816
          %v818 = vadd.f32 %v814, %v817
          %vm819 = vweird.f32 %v596
          %vm820 = vweird.f32 %v814
          %vm821 = vmor %vm819, %vm820
          %v822 = vsel %vm821, %v814, %v818
          %v823 = vand.u32 2147483647, %v596
          %vm824 = vcmp.eq.f32.partialorder %v823, 8.507059e+37
          %v825 = vand.u32 %v596, 2147483648
          %v826 = vor.u32 1.1754944e-38, %v825
          %v827 = vsel %vm824, %v826, %v822
          %v828 = vmul.f32 1.0, %v827
          %v829 = vrcp.pop %v597
          %v830 = vmul.f32 %v597, %v829
          %v831 = vsub.f32 1.0, %v830
          %v832 = vmul.f32 %v829, %v831
          %v833 = vadd.f32 %v829, %v832
          %vm834 = vweird.f32 %v597
          %vm835 = vweird.f32 %v829
          %vm836 = vmor %vm834, %vm835
          %v837 = vsel %vm836, %v829, %v833
          %v838 = vand.u32 2147483647, %v597
          %vm839 = vcmp.eq.f32.partialorder %v838, 8.507059e+37
          %v840 = vand.u32 %v597, 2147483648
          %v841 = vor.u32 1.1754944e-38, %v840
          %v842 = vsel %vm839, %v841, %v837
          %v843 = vmul.f32 1.0, %v842
          %v844 = vrcp.pop %v598
          %v845 = vmul.f32 %v598, %v844
          %v846 = vsub.f32 1.0, %v845
          %v847 = vmul.f32 %v844, %v846
          %v848 = vadd.f32 %v844, %v847
          %vm849 = vweird.f32 %v598
          %vm850 = vweird.f32 %v844
          %vm851 = vmor %vm849, %vm850
          %v852 = vsel %vm851, %v844, %v848
          %v853 = vand.u32 2147483647, %v598
          %vm854 = vcmp.eq.f32.partialorder %v853, 8.507059e+37
          %v855 = vand.u32 %v598, 2147483648
          %v856 = vor.u32 1.1754944e-38, %v855
          %v857 = vsel %vm854, %v856, %v852
          %v858 = vmul.f32 1.0, %v857
          %v859 = vrcp.pop %v599
          %v860 = vmul.f32 %v599, %v859
          %v861 = vsub.f32 1.0, %v860
          %v862 = vmul.f32 %v859, %v861
          %v863 = vadd.f32 %v859, %v862
          %vm864 = vweird.f32 %v599
          %vm865 = vweird.f32 %v859
          %vm866 = vmor %vm864, %vm865
          %v867 = vsel %vm866, %v859, %v863
          %v868 = vand.u32 2147483647, %v599
          %vm869 = vcmp.eq.f32.partialorder %v868, 8.507059e+37
          %v870 = vand.u32 %v599, 2147483648
          %v871 = vor.u32 1.1754944e-38, %v870
          %v872 = vsel %vm869, %v871, %v867
          %v873 = vmul.f32 1.0, %v872
          %v874 = vrcp.pop %v600
          %v875 = vmul.f32 %v600, %v874
          %v876 = vsub.f32 1.0, %v875
          %v877 = vmul.f32 %v874, %v876
          %v878 = vadd.f32 %v874, %v877
          %vm879 = vweird.f32 %v600
          %vm880 = vweird.f32 %v874
          %vm881 = vmor %vm879, %vm880
          %v882 = vsel %vm881, %v874, %v878
          %v883 = vand.u32 2147483647, %v600
          %vm884 = vcmp.eq.f32.partialorder %v883, 8.507059e+37
          %v885 = vand.u32 %v600, 2147483648
          %v886 = vor.u32 1.1754944e-38, %v885
          %v887 = vsel %vm884, %v886, %v882
          %v888 = vmul.f32 1.0, %v887
          %v889 = vrcp.pop %v601
          %v890 = vmul.f32 %v601, %v889
          %v891 = vsub.f32 1.0, %v890
          %v892 = vmul.f32 %v889, %v891
          %v893 = vadd.f32 %v889, %v892
          %vm894 = vweird.f32 %v601
          %vm895 = vweird.f32 %v889
          %vm896 = vmor %vm894, %vm895
          %v897 = vsel %vm896, %v889, %v893
          %v898 = vand.u32 2147483647, %v601
          %vm899 = vcmp.eq.f32.partialorder %v898, 8.507059e+37
          %v900 = vand.u32 %v601, 2147483648
          %v901 = vor.u32 1.1754944e-38, %v900
          %v902 = vsel %vm899, %v901, %v897
          %v903 = vmul.f32 1.0, %v902
          %v904 = vrcp.pop %v602
          %v905 = vmul.f32 %v602, %v904
          %v906 = vsub.f32 1.0, %v905
          %v907 = vmul.f32 %v904, %v906
          %v908 = vadd.f32 %v904, %v907
          %vm909 = vweird.f32 %v602
          %vm910 = vweird.f32 %v904
          %vm911 = vmor %vm909, %vm910
          %v912 = vsel %vm911, %v904, %v908
          %v913 = vand.u32 2147483647, %v602
          %vm914 = vcmp.eq.f32.partialorder %v913, 8.507059e+37
          %v915 = vand.u32 %v602, 2147483648
          %v916 = vor.u32 1.1754944e-38, %v915
          %v917 = vsel %vm914, %v916, %v912
          %v918 = vmul.f32 1.0, %v917
          %v919 = vrcp.pop %v603
          %v920 = vmul.f32 %v603, %v919
          %v921 = vsub.f32 1.0, %v920
          %v922 = vmul.f32 %v919, %v921
          %v923 = vadd.f32 %v919, %v922
          %vm924 = vweird.f32 %v603
          %vm925 = vweird.f32 %v919
          %vm926 = vmor %vm924, %vm925
          %v927 = vsel %vm926, %v919, %v923
          %v928 = vand.u32 2147483647, %v603
          %vm929 = vcmp.eq.f32.partialorder %v928, 8.507059e+37
          %v930 = vand.u32 %v603, 2147483648
          %v931 = vor.u32 1.1754944e-38, %v930
          %v932 = vsel %vm929, %v931, %v927
          %v933 = vmul.f32 1.0, %v932
          %v934 = vrcp.pop %v604
          %v935 = vmul.f32 %v604, %v934
          %v936 = vsub.f32 1.0, %v935
          %v937 = vmul.f32 %v934, %v936
          %v938 = vadd.f32 %v934, %v937
          %vm939 = vweird.f32 %v604
          %vm940 = vweird.f32 %v934
          %vm941 = vmor %vm939, %vm940
          %v942 = vsel %vm941, %v934, %v938
          %v943 = vand.u32 2147483647, %v604
          %vm944 = vcmp.eq.f32.partialorder %v943, 8.507059e+37
          %v945 = vand.u32 %v604, 2147483648
          %v946 = vor.u32 1.1754944e-38, %v945
          %v947 = vsel %vm944, %v946, %v942
          %v948 = vmul.f32 1.0, %v947
          %v949 = vrcp.pop %v605
          %v950 = vmul.f32 %v605, %v949
          %v951 = vsub.f32 1.0, %v950
          %v952 = vmul.f32 %v949, %v951
          %v953 = vadd.f32 %v949, %v952
          %vm954 = vweird.f32 %v605
          %vm955 = vweird.f32 %v949
          %vm956 = vmor %vm954, %vm955
          %v957 = vsel %vm956, %v949, %v953
          %v958 = vand.u32 2147483647, %v605
          %vm959 = vcmp.eq.f32.partialorder %v958, 8.507059e+37
          %v960 = vand.u32 %v605, 2147483648
          %v961 = vor.u32 1.1754944e-38, %v960
          %v962 = vsel %vm959, %v961, %v957
          %v963 = vmul.f32 1.0, %v962
          %v964 = vrcp.pop %v606
          %v965 = vmul.f32 %v606, %v964
          %v966 = vsub.f32 1.0, %v965
          %v967 = vmul.f32 %v964, %v966
          %v968 = vadd.f32 %v964, %v967
          %vm969 = vweird.f32 %v606
          %vm970 = vweird.f32 %v964
          %vm971 = vmor %vm969, %vm970
          %v972 = vsel %vm971, %v964, %v968
          %v973 = vand.u32 2147483647, %v606
          %vm974 = vcmp.eq.f32.partialorder %v973, 8.507059e+37
          %v975 = vand.u32 %v606, 2147483648
          %v976 = vor.u32 1.1754944e-38, %v975
          %v977 = vsel %vm974, %v976, %v972
          %v978 = vmul.f32 1.0, %v977
          %v979 = vrcp.pop %v607
          %v980 = vmul.f32 %v607, %v979
          %v981 = vsub.f32 1.0, %v980
          %v982 = vmul.f32 %v979, %v981
          %v983 = vadd.f32 %v979, %v982
          %vm984 = vweird.f32 %v607
          %vm985 = vweird.f32 %v979
          %vm986 = vmor %vm984, %vm985
          %v987 = vsel %vm986, %v979, %v983
          %v988 = vand.u32 2147483647, %v607
          %vm989 = vcmp.eq.f32.partialorder %v988, 8.507059e+37
          %v990 = vand.u32 %v607, 2147483648
          %v991 = vor.u32 1.1754944e-38, %v990
          %v992 = vsel %vm989, %v991, %v987
          %v993 = vmul.f32 1.0, %v992
          %v994 = vrcp.pop %v608
          %v995 = vmul.f32 %v608, %v994
          %v996 = vsub.f32 1.0, %v995
          %v997 = vmul.f32 %v994, %v996
          %v998 = vadd.f32 %v994, %v997
          %vm999 = vweird.f32 %v608
          %vm1000 = vweird.f32 %v994
          %vm1001 = vmor %vm999, %vm1000
          %v1002 = vsel %vm1001, %v994, %v998
          %v1003 = vand.u32 2147483647, %v608
          %vm1004 = vcmp.eq.f32.partialorder %v1003, 8.507059e+37
          %v1005 = vand.u32 %v608, 2147483648
          %v1006 = vor.u32 1.1754944e-38, %v1005
          %v1007 = vsel %vm1004, %v1006, %v1002
          %v1008 = vmul.f32 1.0, %v1007
          %v1009 = vrcp.pop %v609
          %v1010 = vmul.f32 %v609, %v1009
          %v1011 = vsub.f32 1.0, %v1010
          %v1012 = vmul.f32 %v1009, %v1011
          %v1013 = vadd.f32 %v1009, %v1012
          %vm1014 = vweird.f32 %v609
          %vm1015 = vweird.f32 %v1009
          %vm1016 = vmor %vm1014, %vm1015
          %v1017 = vsel %vm1016, %v1009, %v1013
          %v1018 = vand.u32 2147483647, %v609
          %vm1019 = vcmp.eq.f32.partialorder %v1018, 8.507059e+37
          %v1020 = vand.u32 %v609, 2147483648
          %v1021 = vor.u32 1.1754944e-38, %v1020
          %v1022 = vsel %vm1019, %v1021, %v1017
          %v1023 = vmul.f32 1.0, %v1022
          %v1024 = vrcp.pop %v610
          %v1025 = vmul.f32 %v610, %v1024
          %v1026 = vsub.f32 1.0, %v1025
          %v1027 = vmul.f32 %v1024, %v1026
          %v1028 = vadd.f32 %v1024, %v1027
          %vm1029 = vweird.f32 %v610
          %vm1030 = vweird.f32 %v1024
          %vm1031 = vmor %vm1029, %vm1030
          %v1032 = vsel %vm1031, %v1024, %v1028
          %v1033 = vand.u32 2147483647, %v610
          %vm1034 = vcmp.eq.f32.partialorder %v1033, 8.507059e+37
          %v1035 = vand.u32 %v610, 2147483648
          %v1036 = vor.u32 1.1754944e-38, %v1035
          %v1037 = vsel %vm1034, %v1036, %v1032
          %v1038 = vmul.f32 1.0, %v1037
          %v1039 = vrcp.pop %v611
          %v1040 = vmul.f32 %v611, %v1039
          %v1041 = vsub.f32 1.0, %v1040
          %v1042 = vmul.f32 %v1039, %v1041
          %v1043 = vadd.f32 %v1039, %v1042
          %vm1044 = vweird.f32 %v611
          %vm1045 = vweird.f32 %v1039
          %vm1046 = vmor %vm1044, %vm1045
          %v1047 = vsel %vm1046, %v1039, %v1043
          %v1048 = vand.u32 2147483647, %v611
          %vm1049 = vcmp.eq.f32.partialorder %v1048, 8.507059e+37
          %v1050 = vand.u32 %v611, 2147483648
          %v1051 = vor.u32 1.1754944e-38, %v1050
          %v1052 = vsel %vm1049, %v1051, %v1047
          %v1053 = vmul.f32 1.0, %v1052
          %v1054 = vrcp.pop %v612
          %v1055 = vmul.f32 %v612, %v1054
          %v1056 = vsub.f32 1.0, %v1055
          %v1057 = vmul.f32 %v1054, %v1056
          %v1058 = vadd.f32 %v1054, %v1057
          %vm1059 = vweird.f32 %v612
          %vm1060 = vweird.f32 %v1054
          %vm1061 = vmor %vm1059, %vm1060
          %v1062 = vsel %vm1061, %v1054, %v1058
          %v1063 = vand.u32 2147483647, %v612
          %vm1064 = vcmp.eq.f32.partialorder %v1063, 8.507059e+37
          %v1065 = vand.u32 %v612, 2147483648
          %v1066 = vor.u32 1.1754944e-38, %v1065
          %v1067 = vsel %vm1064, %v1066, %v1062
          %v1068 = vmul.f32 1.0, %v1067
          %v1069 = vrcp.pop %v613
          %v1070 = vmul.f32 %v613, %v1069
          %v1071 = vsub.f32 1.0, %v1070
          %v1072 = vmul.f32 %v1069, %v1071
          %v1073 = vadd.f32 %v1069, %v1072
          %vm1074 = vweird.f32 %v613
          %vm1075 = vweird.f32 %v1069
          %vm1076 = vmor %vm1074, %vm1075
          %v1077 = vsel %vm1076, %v1069, %v1073
          %v1078 = vand.u32 2147483647, %v613
          %vm1079 = vcmp.eq.f32.partialorder %v1078, 8.507059e+37
          %v1080 = vand.u32 %v613, 2147483648
          %v1081 = vor.u32 1.1754944e-38, %v1080
          %v1082 = vsel %vm1079, %v1081, %v1077
          %v1083 = vmul.f32 1.0, %v1082
          %v1084 = vrcp.pop %v614
          %v1085 = vmul.f32 %v614, %v1084
          %v1086 = vsub.f32 1.0, %v1085
          %v1087 = vmul.f32 %v1084, %v1086
          %v1088 = vadd.f32 %v1084, %v1087
          %vm1089 = vweird.f32 %v614
          %vm1090 = vweird.f32 %v1084
          %vm1091 = vmor %vm1089, %vm1090
          %v1092 = vsel %vm1091, %v1084, %v1088
          %v1093 = vand.u32 2147483647, %v614
          %vm1094 = vcmp.eq.f32.partialorder %v1093, 8.507059e+37
          %v1095 = vand.u32 %v614, 2147483648
          %v1096 = vor.u32 1.1754944e-38, %v1095
          %v1097 = vsel %vm1094, %v1096, %v1092
          %v1098 = vmul.f32 1.0, %v1097
          %v1099 = vrcp.pop %v615
          %v1100 = vmul.f32 %v615, %v1099
          %v1101 = vsub.f32 1.0, %v1100
          %v1102 = vmul.f32 %v1099, %v1101
          %v1103 = vadd.f32 %v1099, %v1102
          %vm1104 = vweird.f32 %v615
          %vm1105 = vweird.f32 %v1099
          %vm1106 = vmor %vm1104, %vm1105
          %v1107 = vsel %vm1106, %v1099, %v1103
          %v1108 = vand.u32 2147483647, %v615
          %vm1109 = vcmp.eq.f32.partialorder %v1108, 8.507059e+37
          %v1110 = vand.u32 %v615, 2147483648
          %v1111 = vor.u32 1.1754944e-38, %v1110
          %v1112 = vsel %vm1109, %v1111, %v1107
          %v1113 = vmul.f32 1.0, %v1112
          %v1114 = vrcp.pop %v616
          %v1115 = vmul.f32 %v616, %v1114
          %v1116 = vsub.f32 1.0, %v1115
          %v1117 = vmul.f32 %v1114, %v1116
          %v1118 = vadd.f32 %v1114, %v1117
          %vm1119 = vweird.f32 %v616
          %vm1120 = vweird.f32 %v1114
          %vm1121 = vmor %vm1119, %vm1120
          %v1122 = vsel %vm1121, %v1114, %v1118
          %v1123 = vand.u32 2147483647, %v616
          %vm1124 = vcmp.eq.f32.partialorder %v1123, 8.507059e+37
          %v1125 = vand.u32 %v616, 2147483648
          %v1126 = vor.u32 1.1754944e-38, %v1125
          %v1127 = vsel %vm1124, %v1126, %v1122
          %v1128 = vmul.f32 1.0, %v1127
          %v1129 = vrcp.pop %v617
          %v1130 = vmul.f32 %v617, %v1129
          %v1131 = vsub.f32 1.0, %v1130
          %v1132 = vmul.f32 %v1129, %v1131
          %v1133 = vadd.f32 %v1129, %v1132
          %vm1134 = vweird.f32 %v617
          %vm1135 = vweird.f32 %v1129
          %vm1136 = vmor %vm1134, %vm1135
          %v1137 = vsel %vm1136, %v1129, %v1133
          %v1138 = vand.u32 2147483647, %v617
          %vm1139 = vcmp.eq.f32.partialorder %v1138, 8.507059e+37
          %v1140 = vand.u32 %v617, 2147483648
          %v1141 = vor.u32 1.1754944e-38, %v1140
          %v1142 = vsel %vm1139, %v1141, %v1137
          %v1143 = vmul.f32 1.0, %v1142
          %v1144 = vrcp.pop %v618
          %v1145 = vmul.f32 %v618, %v1144
          %v1146 = vsub.f32 1.0, %v1145
          %v1147 = vmul.f32 %v1144, %v1146
          %v1148 = vadd.f32 %v1144, %v1147
          %vm1149 = vweird.f32 %v618
          %vm1150 = vweird.f32 %v1144
          %vm1151 = vmor %vm1149, %vm1150
          %v1152 = vsel %vm1151, %v1144, %v1148
          %v1153 = vand.u32 2147483647, %v618
          %vm1154 = vcmp.eq.f32.partialorder %v1153, 8.507059e+37
          %v1155 = vand.u32 %v618, 2147483648
          %v1156 = vor.u32 1.1754944e-38, %v1155
          %v1157 = vsel %vm1154, %v1156, %v1152
          %v1158 = vmul.f32 1.0, %v1157
          %v1159 = vrcp.pop %v619
          %v1160 = vmul.f32 %v619, %v1159
          %v1161 = vsub.f32 1.0, %v1160
          %v1162 = vmul.f32 %v1159, %v1161
          %v1163 = vadd.f32 %v1159, %v1162
          %vm1164 = vweird.f32 %v619
          %vm1165 = vweird.f32 %v1159
          %vm1166 = vmor %vm1164, %vm1165
          %v1167 = vsel %vm1166, %v1159, %v1163
          %v1168 = vand.u32 2147483647, %v619
          %vm1169 = vcmp.eq.f32.partialorder %v1168, 8.507059e+37
          %v1170 = vand.u32 %v619, 2147483648
          %v1171 = vor.u32 1.1754944e-38, %v1170
          %v1172 = vsel %vm1169, %v1171, %v1167
          %v1173 = vmul.f32 1.0, %v1172
          %v1174 = vrcp.pop %v620
          %v1175 = vmul.f32 %v620, %v1174
          %v1176 = vsub.f32 1.0, %v1175
          %v1177 = vmul.f32 %v1174, %v1176
          %v1178 = vadd.f32 %v1174, %v1177
          %vm1179 = vweird.f32 %v620
          %vm1180 = vweird.f32 %v1174
          %vm1181 = vmor %vm1179, %vm1180
          %v1182 = vsel %vm1181, %v1174, %v1178
          %v1183 = vand.u32 2147483647, %v620
          %vm1184 = vcmp.eq.f32.partialorder %v1183, 8.507059e+37
          %v1185 = vand.u32 %v620, 2147483648
          %v1186 = vor.u32 1.1754944e-38, %v1185
          %v1187 = vsel %vm1184, %v1186, %v1182
          %v1188 = vmul.f32 1.0, %v1187
          %v1189 = vrcp.pop %v621
          %v1190 = vmul.f32 %v621, %v1189
          %v1191 = vsub.f32 1.0, %v1190
          %v1192 = vmul.f32 %v1189, %v1191
          %v1193 = vadd.f32 %v1189, %v1192
          %vm1194 = vweird.f32 %v621
          %vm1195 = vweird.f32 %v1189
          %vm1196 = vmor %vm1194, %vm1195
          %v1197 = vsel %vm1196, %v1189, %v1193
          %v1198 = vand.u32 2147483647, %v621
          %vm1199 = vcmp.eq.f32.partialorder %v1198, 8.507059e+37
          %v1200 = vand.u32 %v621, 2147483648
          %v1201 = vor.u32 1.1754944e-38, %v1200
          %v1202 = vsel %vm1199, %v1201, %v1197
          %v1203 = vmul.f32 1.0, %v1202
          %v1204 = vrcp.pop %v622
          %v1205 = vmul.f32 %v622, %v1204
          %v1206 = vsub.f32 1.0, %v1205
          %v1207 = vmul.f32 %v1204, %v1206
          %v1208 = vadd.f32 %v1204, %v1207
          %vm1209 = vweird.f32 %v622
          %vm1210 = vweird.f32 %v1204
          %vm1211 = vmor %vm1209, %vm1210
          %v1212 = vsel %vm1211, %v1204, %v1208
          %v1213 = vand.u32 2147483647, %v622
          %vm1214 = vcmp.eq.f32.partialorder %v1213, 8.507059e+37
          %v1215 = vand.u32 %v622, 2147483648
          %v1216 = vor.u32 1.1754944e-38, %v1215
          %v1217 = vsel %vm1214, %v1216, %v1212
          %v1218 = vmul.f32 1.0, %v1217
          %v1219 = vrcp.pop %v623
          %v1220 = vmul.f32 %v623, %v1219
          %v1221 = vsub.f32 1.0, %v1220
          %v1222 = vmul.f32 %v1219, %v1221
          %v1223 = vadd.f32 %v1219, %v1222
          %vm1224 = vweird.f32 %v623
          %vm1225 = vweird.f32 %v1219
          %vm1226 = vmor %vm1224, %vm1225
          %v1227 = vsel %vm1226, %v1219, %v1223
          %v1228 = vand.u32 2147483647, %v623
          %vm1229 = vcmp.eq.f32.partialorder %v1228, 8.507059e+37
          %v1230 = vand.u32 %v623, 2147483648
          %v1231 = vor.u32 1.1754944e-38, %v1230
          %v1232 = vsel %vm1229, %v1231, %v1227
          %v1233 = vmul.f32 1.0, %v1232
          %v1234 = vrcp.pop %v624
          %v1235 = vmul.f32 %v624, %v1234
          %v1236 = vsub.f32 1.0, %v1235
          %v1237 = vmul.f32 %v1234, %v1236
          %v1238 = vadd.f32 %v1234, %v1237
          %vm1239 = vweird.f32 %v624
          %vm1240 = vweird.f32 %v1234
          %vm1241 = vmor %vm1239, %vm1240
          %v1242 = vsel %vm1241, %v1234, %v1238
          %v1243 = vand.u32 2147483647, %v624
          %vm1244 = vcmp.eq.f32.partialorder %v1243, 8.507059e+37
          %v1245 = vand.u32 %v624, 2147483648
          %v1246 = vor.u32 1.1754944e-38, %v1245
          %v1247 = vsel %vm1244, %v1246, %v1242
          %v1248 = vmul.f32 1.0, %v1247
          %v1249 = vrcp.pop %v625
          %v1250 = vmul.f32 %v625, %v1249
          %v1251 = vsub.f32 1.0, %v1250
          %v1252 = vmul.f32 %v1249, %v1251
          %v1253 = vadd.f32 %v1249, %v1252
          %vm1254 = vweird.f32 %v625
          %vm1255 = vweird.f32 %v1249
          %vm1256 = vmor %vm1254, %vm1255
          %v1257 = vsel %vm1256, %v1249, %v1253
          %v1258 = vand.u32 2147483647, %v625
          %vm1259 = vcmp.eq.f32.partialorder %v1258, 8.507059e+37
          %v1260 = vand.u32 %v625, 2147483648
          %v1261 = vor.u32 1.1754944e-38, %v1260
          %v1262 = vsel %vm1259, %v1261, %v1257
          %v1263 = vmul.f32 1.0, %v1262
          %v1264 = vrcp.pop %v626
          %v1265 = vmul.f32 %v626, %v1264
          %v1266 = vsub.f32 1.0, %v1265
          %v1267 = vmul.f32 %v1264, %v1266
          %v1268 = vadd.f32 %v1264, %v1267
          %vm1269 = vweird.f32 %v626
          %vm1270 = vweird.f32 %v1264
          %vm1271 = vmor %vm1269, %vm1270
          %v1272 = vsel %vm1271, %v1264, %v1268
          %v1273 = vand.u32 2147483647, %v626
          %vm1274 = vcmp.eq.f32.partialorder %v1273, 8.507059e+37
          %v1275 = vand.u32 %v626, 2147483648
          %v1276 = vor.u32 1.1754944e-38, %v1275
          %v1277 = vsel %vm1274, %v1276, %v1272
          %v1278 = vmul.f32 1.0, %v1277
          %v1279 = vrcp.pop %v627
          %v1280 = vmul.f32 %v627, %v1279
          %v1281 = vsub.f32 1.0, %v1280
          %v1282 = vmul.f32 %v1279, %v1281
          %v1283 = vadd.f32 %v1279, %v1282
          %vm1284 = vweird.f32 %v627
          %vm1285 = vweird.f32 %v1279
          %vm1286 = vmor %vm1284, %vm1285
          %v1287 = vsel %vm1286, %v1279, %v1283
          %v1288 = vand.u32 2147483647, %v627
          %vm1289 = vcmp.eq.f32.partialorder %v1288, 8.507059e+37
          %v1290 = vand.u32 %v627, 2147483648
          %v1291 = vor.u32 1.1754944e-38, %v1290
          %v1292 = vsel %vm1289, %v1291, %v1287
          %v1293 = vmul.f32 1.0, %v1292
          %v1294 = vrcp.pop %v628
          %v1295 = vmul.f32 %v628, %v1294
          %v1296 = vsub.f32 1.0, %v1295
          %v1297 = vmul.f32 %v1294, %v1296
          %v1298 = vadd.f32 %v1294, %v1297
          %vm1299 = vweird.f32 %v628
          %vm1300 = vweird.f32 %v1294
          %vm1301 = vmor %vm1299, %vm1300
          %v1302 = vsel %vm1301, %v1294, %v1298
          %v1303 = vand.u32 2147483647, %v628
          %vm1304 = vcmp.eq.f32.partialorder %v1303, 8.507059e+37
          %v1305 = vand.u32 %v628, 2147483648
          %v1306 = vor.u32 1.1754944e-38, %v1305
          %v1307 = vsel %vm1304, %v1306, %v1302
          %v1308 = vmul.f32 1.0, %v1307
          %v1309 = vrcp.pop %v629
          %v1310 = vmul.f32 %v629, %v1309
          %v1311 = vsub.f32 1.0, %v1310
          %v1312 = vmul.f32 %v1309, %v1311
          %v1313 = vadd.f32 %v1309, %v1312
          %vm1314 = vweird.f32 %v629
          %vm1315 = vweird.f32 %v1309
          %vm1316 = vmor %vm1314, %vm1315
          %v1317 = vsel %vm1316, %v1309, %v1313
          %v1318 = vand.u32 2147483647, %v629
          %vm1319 = vcmp.eq.f32.partialorder %v1318, 8.507059e+37
          %v1320 = vand.u32 %v629, 2147483648
          %v1321 = vor.u32 1.1754944e-38, %v1320
          %v1322 = vsel %vm1319, %v1321, %v1317
          %v1323 = vmul.f32 1.0, %v1322
          %v1324 = vrcp.pop %v630
          %v1325 = vmul.f32 %v630, %v1324
          %v1326 = vsub.f32 1.0, %v1325
          %v1327 = vmul.f32 %v1324, %v1326
          %v1328 = vadd.f32 %v1324, %v1327
          %vm1329 = vweird.f32 %v630
          %vm1330 = vweird.f32 %v1324
          %vm1331 = vmor %vm1329, %vm1330
          %v1332 = vsel %vm1331, %v1324, %v1328
          %v1333 = vand.u32 2147483647, %v630
          %vm1334 = vcmp.eq.f32.partialorder %v1333, 8.507059e+37
          %v1335 = vand.u32 %v630, 2147483648
          %v1336 = vor.u32 1.1754944e-38, %v1335
          %v1337 = vsel %vm1334, %v1336, %v1332
          %v1338 = vmul.f32 1.0, %v1337
          %v1339 = vrcp.pop %v631
          %v1340 = vmul.f32 %v631, %v1339
          %v1341 = vsub.f32 1.0, %v1340
          %v1342 = vmul.f32 %v1339, %v1341
          %v1343 = vadd.f32 %v1339, %v1342
          %vm1344 = vweird.f32 %v631
          %vm1345 = vweird.f32 %v1339
          %vm1346 = vmor %vm1344, %vm1345
          %v1347 = vsel %vm1346, %v1339, %v1343
          %v1348 = vand.u32 2147483647, %v631
          %vm1349 = vcmp.eq.f32.partialorder %v1348, 8.507059e+37
          %v1350 = vand.u32 %v631, 2147483648
          %v1351 = vor.u32 1.1754944e-38, %v1350
          %v1352 = vsel %vm1349, %v1351, %v1347
          %v1353 = vmul.f32 1.0, %v1352
          %v1354 = vrcp.pop %v632
          %v1355 = vmul.f32 %v632, %v1354
          %v1356 = vsub.f32 1.0, %v1355
          %v1357 = vmul.f32 %v1354, %v1356
          %v1358 = vadd.f32 %v1354, %v1357
          %vm1359 = vweird.f32 %v632
          %vm1360 = vweird.f32 %v1354
          %vm1361 = vmor %vm1359, %vm1360
          %v1362 = vsel %vm1361, %v1354, %v1358
          %v1363 = vand.u32 2147483647, %v632
          %vm1364 = vcmp.eq.f32.partialorder %v1363, 8.507059e+37
          %v1365 = vand.u32 %v632, 2147483648
          %v1366 = vor.u32 1.1754944e-38, %v1365
          %v1367 = vsel %vm1364, %v1366, %v1362
          %v1368 = vmul.f32 1.0, %v1367
          %v1369 = vrcp.pop %v633
          %v1370 = vmul.f32 %v633, %v1369
          %v1371 = vsub.f32 1.0, %v1370
          %v1372 = vmul.f32 %v1369, %v1371
          %v1373 = vadd.f32 %v1369, %v1372
          %vm1374 = vweird.f32 %v633
          %vm1375 = vweird.f32 %v1369
          %vm1376 = vmor %vm1374, %vm1375
          %v1377 = vsel %vm1376, %v1369, %v1373
          %v1378 = vand.u32 2147483647, %v633
          %vm1379 = vcmp.eq.f32.partialorder %v1378, 8.507059e+37
          %v1380 = vand.u32 %v633, 2147483648
          %v1381 = vor.u32 1.1754944e-38, %v1380
          %v1382 = vsel %vm1379, %v1381, %v1377
          %v1383 = vmul.f32 1.0, %v1382
          %v1384 = vrcp.pop %v634
          %v1385 = vmul.f32 %v634, %v1384
          %v1386 = vsub.f32 1.0, %v1385
          %v1387 = vmul.f32 %v1384, %v1386
          %v1388 = vadd.f32 %v1384, %v1387
          %vm1389 = vweird.f32 %v634
          %vm1390 = vweird.f32 %v1384
          %vm1391 = vmor %vm1389, %vm1390
          %v1392 = vsel %vm1391, %v1384, %v1388
          %v1393 = vand.u32 2147483647, %v634
          %vm1394 = vcmp.eq.f32.partialorder %v1393, 8.507059e+37
          %v1395 = vand.u32 %v634, 2147483648
          %v1396 = vor.u32 1.1754944e-38, %v1395
          %v1397 = vsel %vm1394, %v1396, %v1392
          %v1398 = vmul.f32 1.0, %v1397
          %v1399 = vrcp.pop %v635
          %v1400 = vmul.f32 %v635, %v1399
          %v1401 = vsub.f32 1.0, %v1400
          %v1402 = vmul.f32 %v1399, %v1401
          %v1403 = vadd.f32 %v1399, %v1402
          %vm1404 = vweird.f32 %v635
          %vm1405 = vweird.f32 %v1399
          %vm1406 = vmor %vm1404, %vm1405
          %v1407 = vsel %vm1406, %v1399, %v1403
          %v1408 = vand.u32 2147483647, %v635
          %vm1409 = vcmp.eq.f32.partialorder %v1408, 8.507059e+37
          %v1410 = vand.u32 %v635, 2147483648
          %v1411 = vor.u32 1.1754944e-38, %v1410
          %v1412 = vsel %vm1409, %v1411, %v1407
          %v1413 = vmul.f32 1.0, %v1412
          %v1414 = vrcp.pop %v636
          %v1415 = vmul.f32 %v636, %v1414
          %v1416 = vsub.f32 1.0, %v1415
          %v1417 = vmul.f32 %v1414, %v1416
          %v1418 = vadd.f32 %v1414, %v1417
          %vm1419 = vweird.f32 %v636
          %vm1420 = vweird.f32 %v1414
          %vm1421 = vmor %vm1419, %vm1420
          %v1422 = vsel %vm1421, %v1414, %v1418
          %v1423 = vand.u32 2147483647, %v636
          %vm1424 = vcmp.eq.f32.partialorder %v1423, 8.507059e+37
          %v1425 = vand.u32 %v636, 2147483648
          %v1426 = vor.u32 1.1754944e-38, %v1425
          %v1427 = vsel %vm1424, %v1426, %v1422
          %v1428 = vmul.f32 1.0, %v1427
          %v1429 = vrcp.pop %v637
          %v1430 = vmul.f32 %v637, %v1429
          %v1431 = vsub.f32 1.0, %v1430
          %v1432 = vmul.f32 %v1429, %v1431
          %v1433 = vadd.f32 %v1429, %v1432
          %vm1434 = vweird.f32 %v637
          %vm1435 = vweird.f32 %v1429
          %vm1436 = vmor %vm1434, %vm1435
          %v1437 = vsel %vm1436, %v1429, %v1433
          %v1438 = vand.u32 2147483647, %v637
          %vm1439 = vcmp.eq.f32.partialorder %v1438, 8.507059e+37
          %v1440 = vand.u32 %v637, 2147483648
          %v1441 = vor.u32 1.1754944e-38, %v1440
          %v1442 = vsel %vm1439, %v1441, %v1437
          %v1443 = vmul.f32 1.0, %v1442
          %v1444 = vrcp.pop %v638
          %v1445 = vmul.f32 %v638, %v1444
          %v1446 = vsub.f32 1.0, %v1445
          %v1447 = vmul.f32 %v1444, %v1446
          %v1448 = vadd.f32 %v1444, %v1447
          %vm1449 = vweird.f32 %v638
          %vm1450 = vweird.f32 %v1444
          %vm1451 = vmor %vm1449, %vm1450
          %v1452 = vsel %vm1451, %v1444, %v1448
          %v1453 = vand.u32 2147483647, %v638
          %vm1454 = vcmp.eq.f32.partialorder %v1453, 8.507059e+37
          %v1455 = vand.u32 %v638, 2147483648
          %v1456 = vor.u32 1.1754944e-38, %v1455
          %v1457 = vsel %vm1454, %v1456, %v1452
          %v1458 = vmul.f32 1.0, %v1457
          %v1459 = vrcp.pop %v639
          %v1460 = vmul.f32 %v639, %v1459
          %v1461 = vsub.f32 1.0, %v1460
          %v1462 = vmul.f32 %v1459, %v1461
          %v1463 = vadd.f32 %v1459, %v1462
          %vm1464 = vweird.f32 %v639
          %vm1465 = vweird.f32 %v1459
          %vm1466 = vmor %vm1464, %vm1465
          %v1467 = vsel %vm1466, %v1459, %v1463
          %v1468 = vand.u32 2147483647, %v639
          %vm1469 = vcmp.eq.f32.partialorder %v1468, 8.507059e+37
          %v1470 = vand.u32 %v639, 2147483648
          %v1471 = vor.u32 1.1754944e-38, %v1470
          %v1472 = vsel %vm1469, %v1471, %v1467
          %v1473 = vmul.f32 1.0, %v1472
          %v1474 = vrcp.pop %v640
          %v1475 = vmul.f32 %v640, %v1474
          %v1476 = vsub.f32 1.0, %v1475
          %v1477 = vmul.f32 %v1474, %v1476
          %v1478 = vadd.f32 %v1474, %v1477
          %vm1479 = vweird.f32 %v640
          %vm1480 = vweird.f32 %v1474
          %vm1481 = vmor %vm1479, %vm1480
          %v1482 = vsel %vm1481, %v1474, %v1478
          %v1483 = vand.u32 2147483647, %v640
          %vm1484 = vcmp.eq.f32.partialorder %v1483, 8.507059e+37
          %v1485 = vand.u32 %v640, 2147483648
          %v1486 = vor.u32 1.1754944e-38, %v1485
          %v1487 = vsel %vm1484, %v1486, %v1482
          %v1488 = vmul.f32 1.0, %v1487
          %v1489 = vrcp.pop %v641
          %v1490 = vmul.f32 %v641, %v1489
          %v1491 = vsub.f32 1.0, %v1490
          %v1492 = vmul.f32 %v1489, %v1491
          %v1493 = vadd.f32 %v1489, %v1492
          %vm1494 = vweird.f32 %v641
          %vm1495 = vweird.f32 %v1489
          %vm1496 = vmor %vm1494, %vm1495
          %v1497 = vsel %vm1496, %v1489, %v1493
          %v1498 = vand.u32 2147483647, %v641
          %vm1499 = vcmp.eq.f32.partialorder %v1498, 8.507059e+37
          %v1500 = vand.u32 %v641, 2147483648
          %v1501 = vor.u32 1.1754944e-38, %v1500
          %v1502 = vsel %vm1499, %v1501, %v1497
          %v1503 = vmul.f32 1.0, %v1502
          %v1504 = vrcp.pop %v642
          %v1505 = vmul.f32 %v642, %v1504
          %v1506 = vsub.f32 1.0, %v1505
          %v1507 = vmul.f32 %v1504, %v1506
          %v1508 = vadd.f32 %v1504, %v1507
          %vm1509 = vweird.f32 %v642
          %vm1510 = vweird.f32 %v1504
          %vm1511 = vmor %vm1509, %vm1510
          %v1512 = vsel %vm1511, %v1504, %v1508
          %v1513 = vand.u32 2147483647, %v642
          %vm1514 = vcmp.eq.f32.partialorder %v1513, 8.507059e+37
          %v1515 = vand.u32 %v642, 2147483648
          %v1516 = vor.u32 1.1754944e-38, %v1515
          %v1517 = vsel %vm1514, %v1516, %v1512
          %v1518 = vmul.f32 1.0, %v1517
          %v1519 = vrcp.pop %v643
          %v1520 = vmul.f32 %v643, %v1519
          %v1521 = vsub.f32 1.0, %v1520
          %v1522 = vmul.f32 %v1519, %v1521
          %v1523 = vadd.f32 %v1519, %v1522
          %vm1524 = vweird.f32 %v643
          %vm1525 = vweird.f32 %v1519
          %vm1526 = vmor %vm1524, %vm1525
          %v1527 = vsel %vm1526, %v1519, %v1523
          %v1528 = vand.u32 2147483647, %v643
          %vm1529 = vcmp.eq.f32.partialorder %v1528, 8.507059e+37
          %v1530 = vand.u32 %v643, 2147483648
          %v1531 = vor.u32 1.1754944e-38, %v1530
          %v1532 = vsel %vm1529, %v1531, %v1527
          %v1533 = vmul.f32 1.0, %v1532
          %v1534 = vrcp.pop %v644
          %v1535 = vmul.f32 %v644, %v1534
          %v1536 = vsub.f32 1.0, %v1535
          %v1537 = vmul.f32 %v1534, %v1536
          %v1538 = vadd.f32 %v1534, %v1537
          %vm1539 = vweird.f32 %v644
          %vm1540 = vweird.f32 %v1534
          %vm1541 = vmor %vm1539, %vm1540
          %v1542 = vsel %vm1541, %v1534, %v1538
          %v1543 = vand.u32 2147483647, %v644
          %vm1544 = vcmp.eq.f32.partialorder %v1543, 8.507059e+37
          %v1545 = vand.u32 %v644, 2147483648
          %v1546 = vor.u32 1.1754944e-38, %v1545
          %v1547 = vsel %vm1544, %v1546, %v1542
          %v1548 = vmul.f32 1.0, %v1547
          %v1549 = vrcp.pop %v645
          %v1550 = vmul.f32 %v645, %v1549
          %v1551 = vsub.f32 1.0, %v1550
          %v1552 = vmul.f32 %v1549, %v1551
          %v1553 = vadd.f32 %v1549, %v1552
          %vm1554 = vweird.f32 %v645
          %vm1555 = vweird.f32 %v1549
          %vm1556 = vmor %vm1554, %vm1555
          %v1557 = vsel %vm1556, %v1549, %v1553
          %v1558 = vand.u32 2147483647, %v645
          %vm1559 = vcmp.eq.f32.partialorder %v1558, 8.507059e+37
          %v1560 = vand.u32 %v645, 2147483648
          %v1561 = vor.u32 1.1754944e-38, %v1560
          %v1562 = vsel %vm1559, %v1561, %v1557
          %v1563 = vmul.f32 1.0, %v1562
          %v1564 = vrcp.pop %v646
          %v1565 = vmul.f32 %v646, %v1564
          %v1566 = vsub.f32 1.0, %v1565
          %v1567 = vmul.f32 %v1564, %v1566
          %v1568 = vadd.f32 %v1564, %v1567
          %vm1569 = vweird.f32 %v646
          %vm1570 = vweird.f32 %v1564
          %vm1571 = vmor %vm1569, %vm1570
          %v1572 = vsel %vm1571, %v1564, %v1568
          %v1573 = vand.u32 2147483647, %v646
          %vm1574 = vcmp.eq.f32.partialorder %v1573, 8.507059e+37
          %v1575 = vand.u32 %v646, 2147483648
          %v1576 = vor.u32 1.1754944e-38, %v1575
          %v1577 = vsel %vm1574, %v1576, %v1572
          %v1578 = vmul.f32 1.0, %v1577
          %v1579 = vrcp.pop %v647
          %v1580 = vmul.f32 %v647, %v1579
          %v1581 = vsub.f32 1.0, %v1580
          %v1582 = vmul.f32 %v1579, %v1581
          %v1583 = vadd.f32 %v1579, %v1582
          %vm1584 = vweird.f32 %v647
          %vm1585 = vweird.f32 %v1579
          %vm1586 = vmor %vm1584, %vm1585
          %v1587 = vsel %vm1586, %v1579, %v1583
          %v1588 = vand.u32 2147483647, %v647
          %vm1589 = vcmp.eq.f32.partialorder %v1588, 8.507059e+37
          %v1590 = vand.u32 %v647, 2147483648
          %v1591 = vor.u32 1.1754944e-38, %v1590
          %v1592 = vsel %vm1589, %v1591, %v1587
          %v1593 = vmul.f32 1.0, %v1592
          %v1594 = vrcp.pop %v648
          %v1595 = vmul.f32 %v648, %v1594
          %v1596 = vsub.f32 1.0, %v1595
          %v1597 = vmul.f32 %v1594, %v1596
          %v1598 = vadd.f32 %v1594, %v1597
          %vm1599 = vweird.f32 %v648
          %vm1600 = vweird.f32 %v1594
          %vm1601 = vmor %vm1599, %vm1600
          %v1602 = vsel %vm1601, %v1594, %v1598
          %v1603 = vand.u32 2147483647, %v648
          %vm1604 = vcmp.eq.f32.partialorder %v1603, 8.507059e+37
          %v1605 = vand.u32 %v648, 2147483648
          %v1606 = vor.u32 1.1754944e-38, %v1605
          %v1607 = vsel %vm1604, %v1606, %v1602
          %v1608 = vmul.f32 1.0, %v1607
          %1609 = vxpose.xlu0.b32.start [1/16] %v663, 128
          %1610 = vxpose.xlu0.b32.cont [2/16] %v693, 128
          %1611 = vxpose.xlu0.b32.cont [3/16] %v723, 128
          %1612 = vxpose.xlu0.b32.cont [4/16] %v753, 128
          %1613 = vxpose.xlu0.b32.cont [5/16] %v783, 128
          %1614 = vxpose.xlu0.b32.cont [6/16] %v813, 128
          %1615 = vxpose.xlu0.b32.cont [7/16] %v843, 128
          %1616 = vxpose.xlu0.b32.cont [8/16] %v873, 128
          %1617 = vxpose.xlu0.b32.cont [9/16] %v903, 128
          %1618 = vxpose.xlu0.b32.cont [10/16] %v933, 128
          %1619 = vxpose.xlu0.b32.cont [11/16] %v963, 128
          %1620 = vxpose.xlu0.b32.cont [12/16] %v993, 128
          %1621 = vxpose.xlu0.b32.cont [13/16] %v1023, 128
          %1622 = vxpose.xlu0.b32.cont [14/16] %v1053, 128
          %1623 = vxpose.xlu0.b32.cont [15/16] %v1083, 128
          %1624 = vxpose.xlu0.b32.end [16/16] %v1113, 128
          %v1625 = vpop.trf.xlu0
          %v1626 = vpop.trf.xlu0
          %v1627 = vpop.trf.xlu0
          %v1628 = vpop.trf.xlu0
          %v1629 = vpop.trf.xlu0
          %v1630 = vpop.trf.xlu0
          %v1631 = vpop.trf.xlu0
          %v1632 = vpop.trf.xlu0
          %v1633 = vpop.trf.xlu0
          %v1634 = vpop.trf.xlu0
          %v1635 = vpop.trf.xlu0
          %v1636 = vpop.trf.xlu0
          %v1637 = vpop.trf.xlu0
          %v1638 = vpop.trf.xlu0
          %v1639 = vpop.trf.xlu0
          %v1640 = vpop.trf.xlu0
          %1641 = vxpose.xlu0.b32.start [1/16] %v678, 128
          %1642 = vxpose.xlu0.b32.cont [2/16] %v708, 128
          %1643 = vxpose.xlu0.b32.cont [3/16] %v738, 128
          %1644 = vxpose.xlu0.b32.cont [4/16] %v768, 128
          %1645 = vxpose.xlu0.b32.cont [5/16] %v798, 128
          %1646 = vxpose.xlu0.b32.cont [6/16] %v828, 128
          %1647 = vxpose.xlu0.b32.cont [7/16] %v858, 128
          %1648 = vxpose.xlu0.b32.cont [8/16] %v888, 128
          %1649 = vxpose.xlu0.b32.cont [9/16] %v918, 128
          %1650 = vxpose.xlu0.b32.cont [10/16] %v948, 128
          %1651 = vxpose.xlu0.b32.cont [11/16] %v978, 128
          %1652 = vxpose.xlu0.b32.cont [12/16] %v1008, 128
          %1653 = vxpose.xlu0.b32.cont [13/16] %v1038, 128
          %1654 = vxpose.xlu0.b32.cont [14/16] %v1068, 128
          %1655 = vxpose.xlu0.b32.cont [15/16] %v1098, 128
          %1656 = vxpose.xlu0.b32.end [16/16] %v1128, 128
          %v1657 = vpop.trf.xlu0
          %v1658 = vpop.trf.xlu0
          %v1659 = vpop.trf.xlu0
          %v1660 = vpop.trf.xlu0
          %v1661 = vpop.trf.xlu0
          %v1662 = vpop.trf.xlu0
          %v1663 = vpop.trf.xlu0
          %v1664 = vpop.trf.xlu0
          %v1665 = vpop.trf.xlu0
          %v1666 = vpop.trf.xlu0
          %v1667 = vpop.trf.xlu0
          %v1668 = vpop.trf.xlu0
          %v1669 = vpop.trf.xlu0
          %v1670 = vpop.trf.xlu0
          %v1671 = vpop.trf.xlu0
          %v1672 = vpop.trf.xlu0
          %1673 = vxpose.xlu0.b32.start [1/16] %v1143, 128
          %1674 = vxpose.xlu0.b32.cont [2/16] %v1173, 128
          %1675 = vxpose.xlu0.b32.cont [3/16] %v1203, 128
          %1676 = vxpose.xlu0.b32.cont [4/16] %v1233, 128
          %1677 = vxpose.xlu0.b32.cont [5/16] %v1263, 128
          %1678 = vxpose.xlu0.b32.cont [6/16] %v1293, 128
          %1679 = vxpose.xlu0.b32.cont [7/16] %v1323, 128
          %1680 = vxpose.xlu0.b32.cont [8/16] %v1353, 128
          %1681 = vxpose.xlu0.b32.cont [9/16] %v1383, 128
          %1682 = vxpose.xlu0.b32.cont [10/16] %v1413, 128
          %1683 = vxpose.xlu0.b32.cont [11/16] %v1443, 128
          %1684 = vxpose.xlu0.b32.cont [12/16] %v1473, 128
          %1685 = vxpose.xlu0.b32.cont [13/16] %v1503, 128
          %1686 = vxpose.xlu0.b32.cont [14/16] %v1533, 128
          %1687 = vxpose.xlu0.b32.cont [15/16] %v1563, 128
          %1688 = vxpose.xlu0.b32.end [16/16] %v1593, 128
          %v1689 = vpop.trf.xlu0
          %v1690 = vpop.trf.xlu0
          %v1691 = vpop.trf.xlu0
          %v1692 = vpop.trf.xlu0
          %v1693 = vpop.trf.xlu0
          %v1694 = vpop.trf.xlu0
          %v1695 = vpop.trf.xlu0
          %v1696 = vpop.trf.xlu0
          %v1697 = vpop.trf.xlu0
          %v1698 = vpop.trf.xlu0
          %v1699 = vpop.trf.xlu0
          %v1700 = vpop.trf.xlu0
          %v1701 = vpop.trf.xlu0
          %v1702 = vpop.trf.xlu0
          %v1703 = vpop.trf.xlu0
          %v1704 = vpop.trf.xlu0
          %1705 = vxpose.xlu0.b32.start [1/16] %v1158, 128
          %1706 = vxpose.xlu0.b32.cont [2/16] %v1188, 128
          %1707 = vxpose.xlu0.b32.cont [3/16] %v1218, 128
          %1708 = vxpose.xlu0.b32.cont [4/16] %v1248, 128
          %1709 = vxpose.xlu0.b32.cont [5/16] %v1278, 128
          %1710 = vxpose.xlu0.b32.cont [6/16] %v1308, 128
          %1711 = vxpose.xlu0.b32.cont [7/16] %v1338, 128
          %1712 = vxpose.xlu0.b32.cont [8/16] %v1368, 128
          %1713 = vxpose.xlu0.b32.cont [9/16] %v1398, 128
          %1714 = vxpose.xlu0.b32.cont [10/16] %v1428, 128
          %1715 = vxpose.xlu0.b32.cont [11/16] %v1458, 128
          %1716 = vxpose.xlu0.b32.cont [12/16] %v1488, 128
          %1717 = vxpose.xlu0.b32.cont [13/16] %v1518, 128
          %1718 = vxpose.xlu0.b32.cont [14/16] %v1548, 128
          %1719 = vxpose.xlu0.b32.cont [15/16] %v1578, 128
          %1720 = vxpose.xlu0.b32.end [16/16] %v1608, 128
          %v1721 = vpop.trf.xlu0
          %v1722 = vpop.trf.xlu0
          %v1723 = vpop.trf.xlu0
          %v1724 = vpop.trf.xlu0
          %v1725 = vpop.trf.xlu0
          %v1726 = vpop.trf.xlu0
          %v1727 = vpop.trf.xlu0
          %v1728 = vpop.trf.xlu0
          %v1729 = vpop.trf.xlu0
          %v1730 = vpop.trf.xlu0
          %v1731 = vpop.trf.xlu0
          %v1732 = vpop.trf.xlu0
          %v1733 = vpop.trf.xlu0
          %v1734 = vpop.trf.xlu0
          %v1735 = vpop.trf.xlu0
          %v1736 = vpop.trf.xlu0
          %v1737 = vadd.f32 %v663, %v1625
          %v1738 = vadd.f32 %v678, %v1689
          %v1739 = vadd.f32 %v693, %v1626
          %v1740 = vadd.f32 %v708, %v1690
          %v1741 = vadd.f32 %v723, %v1627
          %v1742 = vadd.f32 %v738, %v1691
          %v1743 = vadd.f32 %v753, %v1628
          %v1744 = vadd.f32 %v768, %v1692
          %v1745 = vadd.f32 %v783, %v1629
          %v1746 = vadd.f32 %v798, %v1693
          %v1747 = vadd.f32 %v813, %v1630
          %v1748 = vadd.f32 %v828, %v1694
          %v1749 = vadd.f32 %v843, %v1631
          %v1750 = vadd.f32 %v858, %v1695
          %v1751 = vadd.f32 %v873, %v1632
          %v1752 = vadd.f32 %v888, %v1696
          %v1753 = vadd.f32 %v903, %v1633
          %v1754 = vadd.f32 %v918, %v1697
          %v1755 = vadd.f32 %v933, %v1634
          %v1756 = vadd.f32 %v948, %v1698
          %v1757 = vadd.f32 %v963, %v1635
          %v1758 = vadd.f32 %v978, %v1699
          %v1759 = vadd.f32 %v993, %v1636
          %v1760 = vadd.f32 %v1008, %v1700
          %v1761 = vadd.f32 %v1023, %v1637
          %v1762 = vadd.f32 %v1038, %v1701
          %v1763 = vadd.f32 %v1053, %v1638
          %v1764 = vadd.f32 %v1068, %v1702
          %v1765 = vadd.f32 %v1083, %v1639
          %v1766 = vadd.f32 %v1098, %v1703
          %v1767 = vadd.f32 %v1113, %v1640
          %v1768 = vadd.f32 %v1128, %v1704
          %v1769 = vadd.f32 %v1143, %v1657
          %v1770 = vadd.f32 %v1158, %v1721
          %v1771 = vadd.f32 %v1173, %v1658
          %v1772 = vadd.f32 %v1188, %v1722
          %v1773 = vadd.f32 %v1203, %v1659
          %v1774 = vadd.f32 %v1218, %v1723
          %v1775 = vadd.f32 %v1233, %v1660
          %v1776 = vadd.f32 %v1248, %v1724
          %v1777 = vadd.f32 %v1263, %v1661
          %v1778 = vadd.f32 %v1278, %v1725
          %v1779 = vadd.f32 %v1293, %v1662
          %v1780 = vadd.f32 %v1308, %v1726
          %v1781 = vadd.f32 %v1323, %v1663
          %v1782 = vadd.f32 %v1338, %v1727
          %v1783 = vadd.f32 %v1353, %v1664
          %v1784 = vadd.f32 %v1368, %v1728
          %v1785 = vadd.f32 %v1383, %v1665
          %v1786 = vadd.f32 %v1398, %v1729
          %v1787 = vadd.f32 %v1413, %v1666
          %v1788 = vadd.f32 %v1428, %v1730
          %v1789 = vadd.f32 %v1443, %v1667
          %v1790 = vadd.f32 %v1458, %v1731
          %v1791 = vadd.f32 %v1473, %v1668
          %v1792 = vadd.f32 %v1488, %v1732
          %v1793 = vadd.f32 %v1503, %v1669
          %v1794 = vadd.f32 %v1518, %v1733
          %v1795 = vadd.f32 %v1533, %v1670
          %v1796 = vadd.f32 %v1548, %v1734
          %v1797 = vadd.f32 %v1563, %v1671
          %v1798 = vadd.f32 %v1578, %v1735
          %v1799 = vadd.f32 %v1593, %v1672
          %v1800 = vadd.f32 %v1608, %v1736
          %v1801 = vmul.f32 %v1737, 0.5
          %v1802 = vmul.f32 %v1738, 0.5
          %v1803 = vmul.f32 %v1739, 0.5
          %v1804 = vmul.f32 %v1740, 0.5
          %v1805 = vmul.f32 %v1741, 0.5
          %v1806 = vmul.f32 %v1742, 0.5
          %v1807 = vmul.f32 %v1743, 0.5
          %v1808 = vmul.f32 %v1744, 0.5
          %v1809 = vmul.f32 %v1745, 0.5
          %v1810 = vmul.f32 %v1746, 0.5
          %v1811 = vmul.f32 %v1747, 0.5
          %v1812 = vmul.f32 %v1748, 0.5
          %v1813 = vmul.f32 %v1749, 0.5
          %v1814 = vmul.f32 %v1750, 0.5
          %v1815 = vmul.f32 %v1751, 0.5
          %v1816 = vmul.f32 %v1752, 0.5
          %v1817 = vmul.f32 %v1753, 0.5
          %v1818 = vmul.f32 %v1754, 0.5
          %v1819 = vmul.f32 %v1755, 0.5
          %v1820 = vmul.f32 %v1756, 0.5
          %v1821 = vmul.f32 %v1757, 0.5
          %v1822 = vmul.f32 %v1758, 0.5
          %v1823 = vmul.f32 %v1759, 0.5
          %v1824 = vmul.f32 %v1760, 0.5
          %v1825 = vmul.f32 %v1761, 0.5
          %v1826 = vmul.f32 %v1762, 0.5
          %v1827 = vmul.f32 %v1763, 0.5
          %v1828 = vmul.f32 %v1764, 0.5
          %v1829 = vmul.f32 %v1765, 0.5
          %v1830 = vmul.f32 %v1766, 0.5
          %v1831 = vmul.f32 %v1767, 0.5
          %v1832 = vmul.f32 %v1768, 0.5
          %v1833 = vmul.f32 %v1769, 0.5
          %v1834 = vmul.f32 %v1770, 0.5
          %v1835 = vmul.f32 %v1771, 0.5
          %v1836 = vmul.f32 %v1772, 0.5
          %v1837 = vmul.f32 %v1773, 0.5
          %v1838 = vmul.f32 %v1774, 0.5
          %v1839 = vmul.f32 %v1775, 0.5
          %v1840 = vmul.f32 %v1776, 0.5
          %v1841 = vmul.f32 %v1777, 0.5
          %v1842 = vmul.f32 %v1778, 0.5
          %v1843 = vmul.f32 %v1779, 0.5
          %v1844 = vmul.f32 %v1780, 0.5
          %v1845 = vmul.f32 %v1781, 0.5
          %v1846 = vmul.f32 %v1782, 0.5
          %v1847 = vmul.f32 %v1783, 0.5
          %v1848 = vmul.f32 %v1784, 0.5
          %v1849 = vmul.f32 %v1785, 0.5
          %v1850 = vmul.f32 %v1786, 0.5
          %v1851 = vmul.f32 %v1787, 0.5
          %v1852 = vmul.f32 %v1788, 0.5
          %v1853 = vmul.f32 %v1789, 0.5
          %v1854 = vmul.f32 %v1790, 0.5
          %v1855 = vmul.f32 %v1791, 0.5
          %v1856 = vmul.f32 %v1792, 0.5
          %v1857 = vmul.f32 %v1793, 0.5
          %v1858 = vmul.f32 %v1794, 0.5
          %v1859 = vmul.f32 %v1795, 0.5
          %v1860 = vmul.f32 %v1796, 0.5
          %v1861 = vmul.f32 %v1797, 0.5
          %v1862 = vmul.f32 %v1798, 0.5
          %v1863 = vmul.f32 %v1799, 0.5
          %v1864 = vmul.f32 %v1800, 0.5
          %v1865 = vlaneseq
          %v1866 = vshrl.u32 %v1865, 7
          %v1867 = vadd.s32 %v1866, 8
          %v1868 = vadd.s32 %v1866, 16
          %v1869 = vadd.s32 %v1866, 24
          %v1870 = vadd.s32 %v1866, 32
          %v1871 = vadd.s32 %v1866, 40
          %v1872 = vadd.s32 %v1866, 48
          %v1873 = vadd.s32 %v1866, 56
          %v1874 = vadd.s32 %v1866, 64
          %v1875 = vadd.s32 %v1866, 72
          %v1876 = vadd.s32 %v1866, 80
          %v1877 = vadd.s32 %v1866, 88
          %v1878 = vadd.s32 %v1866, 96
          %v1879 = vadd.s32 %v1866, 104
          %v1880 = vadd.s32 %v1866, 112
          %v1881 = vadd.s32 %v1866, 120
          %v1882 = vadd.s32 %v1866, 128
          %v1883 = vadd.s32 %v1866, 136
          %v1884 = vadd.s32 %v1866, 144
          %v1885 = vadd.s32 %v1866, 152
          %v1886 = vadd.s32 %v1866, 160
          %v1887 = vadd.s32 %v1866, 168
          %v1888 = vadd.s32 %v1866, 176
          %v1889 = vadd.s32 %v1866, 184
          %v1890 = vadd.s32 %v1866, 192
          %v1891 = vadd.s32 %v1866, 200
          %v1892 = vadd.s32 %v1866, 208
          %v1893 = vadd.s32 %v1866, 216
          %v1894 = vadd.s32 %v1866, 224
          %v1895 = vadd.s32 %v1866, 232
          %v1896 = vadd.s32 %v1866, 240
          %v1897 = vadd.s32 %v1866, 248
          %s1898 = smul.u32 %s30, 256
          %v1899 = vstv %s1898
          %v1900 = vadd.s32 %v1866, %v1899
          %v1901 = vadd.s32 %v1867, %v1899
          %v1902 = vadd.s32 %v1868, %v1899
          %v1903 = vadd.s32 %v1869, %v1899
          %v1904 = vadd.s32 %v1870, %v1899
          %v1905 = vadd.s32 %v1871, %v1899
          %v1906 = vadd.s32 %v1872, %v1899
          %v1907 = vadd.s32 %v1873, %v1899
          %v1908 = vadd.s32 %v1874, %v1899
          %v1909 = vadd.s32 %v1875, %v1899
          %v1910 = vadd.s32 %v1876, %v1899
          %v1911 = vadd.s32 %v1877, %v1899
          %v1912 = vadd.s32 %v1878, %v1899
          %v1913 = vadd.s32 %v1879, %v1899
          %v1914 = vadd.s32 %v1880, %v1899
          %v1915 = vadd.s32 %v1881, %v1899
          %v1916 = vadd.s32 %v1882, %v1899
          %v1917 = vadd.s32 %v1883, %v1899
          %v1918 = vadd.s32 %v1884, %v1899
          %v1919 = vadd.s32 %v1885, %v1899
          %v1920 = vadd.s32 %v1886, %v1899
          %v1921 = vadd.s32 %v1887, %v1899
          %v1922 = vadd.s32 %v1888, %v1899
          %v1923 = vadd.s32 %v1889, %v1899
          %v1924 = vadd.s32 %v1890, %v1899
          %v1925 = vadd.s32 %v1891, %v1899
          %v1926 = vadd.s32 %v1892, %v1899
          %v1927 = vadd.s32 %v1893, %v1899
          %v1928 = vadd.s32 %v1894, %v1899
          %v1929 = vadd.s32 %v1895, %v1899
          %v1930 = vadd.s32 %v1896, %v1899
          %v1931 = vadd.s32 %v1897, %v1899
          %v1932 = vlaneseq
          %v1933 = vand.u32 %v1932, 127
          %v1934 = vadd.s32 %v1933, 128
          %vm1935 = vcmp.eq.s32.totalorder %v1900, %v1933
          %vm1936 = vcmp.eq.s32.totalorder %v1900, %v1934
          %vm1937 = vcmp.eq.s32.totalorder %v1901, %v1933
          %vm1938 = vcmp.eq.s32.totalorder %v1901, %v1934
          %vm1939 = vcmp.eq.s32.totalorder %v1902, %v1933
          %vm1940 = vcmp.eq.s32.totalorder %v1902, %v1934
          %vm1941 = vcmp.eq.s32.totalorder %v1903, %v1933
          %vm1942 = vcmp.eq.s32.totalorder %v1903, %v1934
          %vm1943 = vcmp.eq.s32.totalorder %v1904, %v1933
          %vm1944 = vcmp.eq.s32.totalorder %v1904, %v1934
          %vm1945 = vcmp.eq.s32.totalorder %v1905, %v1933
          %vm1946 = vcmp.eq.s32.totalorder %v1905, %v1934
          %vm1947 = vcmp.eq.s32.totalorder %v1906, %v1933
          %vm1948 = vcmp.eq.s32.totalorder %v1906, %v1934
          %vm1949 = vcmp.eq.s32.totalorder %v1907, %v1933
          %vm1950 = vcmp.eq.s32.totalorder %v1907, %v1934
          %vm1951 = vcmp.eq.s32.totalorder %v1908, %v1933
          %vm1952 = vcmp.eq.s32.totalorder %v1908, %v1934
          %vm1953 = vcmp.eq.s32.totalorder %v1909, %v1933
          %vm1954 = vcmp.eq.s32.totalorder %v1909, %v1934
          %vm1955 = vcmp.eq.s32.totalorder %v1910, %v1933
          %vm1956 = vcmp.eq.s32.totalorder %v1910, %v1934
          %vm1957 = vcmp.eq.s32.totalorder %v1911, %v1933
          %vm1958 = vcmp.eq.s32.totalorder %v1911, %v1934
          %vm1959 = vcmp.eq.s32.totalorder %v1912, %v1933
          %vm1960 = vcmp.eq.s32.totalorder %v1912, %v1934
          %vm1961 = vcmp.eq.s32.totalorder %v1913, %v1933
          %vm1962 = vcmp.eq.s32.totalorder %v1913, %v1934
          %vm1963 = vcmp.eq.s32.totalorder %v1914, %v1933
          %vm1964 = vcmp.eq.s32.totalorder %v1914, %v1934
          %vm1965 = vcmp.eq.s32.totalorder %v1915, %v1933
          %vm1966 = vcmp.eq.s32.totalorder %v1915, %v1934
          %vm1967 = vcmp.eq.s32.totalorder %v1916, %v1933
          %vm1968 = vcmp.eq.s32.totalorder %v1916, %v1934
          %vm1969 = vcmp.eq.s32.totalorder %v1917, %v1933
          %vm1970 = vcmp.eq.s32.totalorder %v1917, %v1934
          %vm1971 = vcmp.eq.s32.totalorder %v1918, %v1933
          %vm1972 = vcmp.eq.s32.totalorder %v1918, %v1934
          %vm1973 = vcmp.eq.s32.totalorder %v1919, %v1933
          %vm1974 = vcmp.eq.s32.totalorder %v1919, %v1934
          %vm1975 = vcmp.eq.s32.totalorder %v1920, %v1933
          %vm1976 = vcmp.eq.s32.totalorder %v1920, %v1934
          %vm1977 = vcmp.eq.s32.totalorder %v1921, %v1933
          %vm1978 = vcmp.eq.s32.totalorder %v1921, %v1934
          %vm1979 = vcmp.eq.s32.totalorder %v1922, %v1933
          %vm1980 = vcmp.eq.s32.totalorder %v1922, %v1934
          %vm1981 = vcmp.eq.s32.totalorder %v1923, %v1933
          %vm1982 = vcmp.eq.s32.totalorder %v1923, %v1934
          %vm1983 = vcmp.eq.s32.totalorder %v1924, %v1933
          %vm1984 = vcmp.eq.s32.totalorder %v1924, %v1934
          %vm1985 = vcmp.eq.s32.totalorder %v1925, %v1933
          %vm1986 = vcmp.eq.s32.totalorder %v1925, %v1934
          %vm1987 = vcmp.eq.s32.totalorder %v1926, %v1933
          %vm1988 = vcmp.eq.s32.totalorder %v1926, %v1934
          %vm1989 = vcmp.eq.s32.totalorder %v1927, %v1933
          %vm1990 = vcmp.eq.s32.totalorder %v1927, %v1934
          %vm1991 = vcmp.eq.s32.totalorder %v1928, %v1933
          %vm1992 = vcmp.eq.s32.totalorder %v1928, %v1934
          %vm1993 = vcmp.eq.s32.totalorder %v1929, %v1933
          %vm1994 = vcmp.eq.s32.totalorder %v1929, %v1934
          %vm1995 = vcmp.eq.s32.totalorder %v1930, %v1933
          %vm1996 = vcmp.eq.s32.totalorder %v1930, %v1934
          %vm1997 = vcmp.eq.s32.totalorder %v1931, %v1933
          %vm1998 = vcmp.eq.s32.totalorder %v1931, %v1934
          %v1999 = vsel %vm1935, 0.0, %v1801
          %v2000 = vsel %vm1936, 0.0, %v1802
          %v2001 = vsel %vm1937, 0.0, %v1803
          %v2002 = vsel %vm1938, 0.0, %v1804
          %v2003 = vsel %vm1939, 0.0, %v1805
          %v2004 = vsel %vm1940, 0.0, %v1806
          %v2005 = vsel %vm1941, 0.0, %v1807
          %v2006 = vsel %vm1942, 0.0, %v1808
          %v2007 = vsel %vm1943, 0.0, %v1809
          %v2008 = vsel %vm1944, 0.0, %v1810
          %v2009 = vsel %vm1945, 0.0, %v1811
          %v2010 = vsel %vm1946, 0.0, %v1812
          %v2011 = vsel %vm1947, 0.0, %v1813
          %v2012 = vsel %vm1948, 0.0, %v1814
          %v2013 = vsel %vm1949, 0.0, %v1815
          %v2014 = vsel %vm1950, 0.0, %v1816
          %v2015 = vsel %vm1951, 0.0, %v1817
          %v2016 = vsel %vm1952, 0.0, %v1818
          %v2017 = vsel %vm1953, 0.0, %v1819
          %v2018 = vsel %vm1954, 0.0, %v1820
          %v2019 = vsel %vm1955, 0.0, %v1821
          %v2020 = vsel %vm1956, 0.0, %v1822
          %v2021 = vsel %vm1957, 0.0, %v1823
          %v2022 = vsel %vm1958, 0.0, %v1824
          %v2023 = vsel %vm1959, 0.0, %v1825
          %v2024 = vsel %vm1960, 0.0, %v1826
          %v2025 = vsel %vm1961, 0.0, %v1827
          %v2026 = vsel %vm1962, 0.0, %v1828
          %v2027 = vsel %vm1963, 0.0, %v1829
          %v2028 = vsel %vm1964, 0.0, %v1830
          %v2029 = vsel %vm1965, 0.0, %v1831
          %v2030 = vsel %vm1966, 0.0, %v1832
          %v2031 = vsel %vm1967, 0.0, %v1833
          %v2032 = vsel %vm1968, 0.0, %v1834
          %v2033 = vsel %vm1969, 0.0, %v1835
          %v2034 = vsel %vm1970, 0.0, %v1836
          %v2035 = vsel %vm1971, 0.0, %v1837
          %v2036 = vsel %vm1972, 0.0, %v1838
          %v2037 = vsel %vm1973, 0.0, %v1839
          %v2038 = vsel %vm1974, 0.0, %v1840
          %v2039 = vsel %vm1975, 0.0, %v1841
          %v2040 = vsel %vm1976, 0.0, %v1842
          %v2041 = vsel %vm1977, 0.0, %v1843
          %v2042 = vsel %vm1978, 0.0, %v1844
          %v2043 = vsel %vm1979, 0.0, %v1845
          %v2044 = vsel %vm1980, 0.0, %v1846
          %v2045 = vsel %vm1981, 0.0, %v1847
          %v2046 = vsel %vm1982, 0.0, %v1848
          %v2047 = vsel %vm1983, 0.0, %v1849
          %v2048 = vsel %vm1984, 0.0, %v1850
          %v2049 = vsel %vm1985, 0.0, %v1851
          %v2050 = vsel %vm1986, 0.0, %v1852
          %v2051 = vsel %vm1987, 0.0, %v1853
          %v2052 = vsel %vm1988, 0.0, %v1854
          %v2053 = vsel %vm1989, 0.0, %v1855
          %v2054 = vsel %vm1990, 0.0, %v1856
          %v2055 = vsel %vm1991, 0.0, %v1857
          %v2056 = vsel %vm1992, 0.0, %v1858
          %v2057 = vsel %vm1993, 0.0, %v1859
          %v2058 = vsel %vm1994, 0.0, %v1860
          %v2059 = vsel %vm1995, 0.0, %v1861
          %v2060 = vsel %vm1996, 0.0, %v1862
          %v2061 = vsel %vm1997, 0.0, %v1863
          %v2062 = vsel %vm1998, 0.0, %v1864
          %2063 = vst [vmem:[#allocation2] sm:$0xff] %v1999
          %2064 = vst [vmem:[#allocation2 + $0x8] sm:$0xff] %v2000
          %2065 = vst [vmem:[#allocation2 + $0x10] sm:$0xff] %v2001
          %2066 = vst [vmem:[#allocation2 + $0x18] sm:$0xff] %v2002
          %2067 = vst [vmem:[#allocation2 + $0x20] sm:$0xff] %v2003
          %2068 = vst [vmem:[#allocation2 + $0x28] sm:$0xff] %v2004
          %2069 = vst [vmem:[#allocation2 + $0x30] sm:$0xff] %v2005
          %2070 = vst [vmem:[#allocation2 + $0x38] sm:$0xff] %v2006
          %2071 = vst [vmem:[#allocation2 + $0x40] sm:$0xff] %v2007
          %2072 = vst [vmem:[#allocation2 + $0x48] sm:$0xff] %v2008
          %2073 = vst [vmem:[#allocation2 + $0x50] sm:$0xff] %v2009
          %2074 = vst [vmem:[#allocation2 + $0x58] sm:$0xff] %v2010
          %2075 = vst [vmem:[#allocation2 + $0x60] sm:$0xff] %v2011
          %2076 = vst [vmem:[#allocation2 + $0x68] sm:$0xff] %v2012
          %2077 = vst [vmem:[#allocation2 + $0x70] sm:$0xff] %v2013
          %2078 = vst [vmem:[#allocation2 + $0x78] sm:$0xff] %v2014
          %2079 = vst [vmem:[#allocation2 + $0x80] sm:$0xff] %v2015
          %2080 = vst [vmem:[#allocation2 + $0x88] sm:$0xff] %v2016
          %2081 = vst [vmem:[#allocation2 + $0x90] sm:$0xff] %v2017
          %2082 = vst [vmem:[#allocation2 + $0x98] sm:$0xff] %v2018
          %2083 = vst [vmem:[#allocation2 + $0xa0] sm:$0xff] %v2019
          %2084 = vst [vmem:[#allocation2 + $0xa8] sm:$0xff] %v2020
          %2085 = vst [vmem:[#allocation2 + $0xb0] sm:$0xff] %v2021
          %2086 = vst [vmem:[#allocation2 + $0xb8] sm:$0xff] %v2022
          %2087 = vst [vmem:[#allocation2 + $0xc0] sm:$0xff] %v2023
          %2088 = vst [vmem:[#allocation2 + $0xc8] sm:$0xff] %v2024
          %2089 = vst [vmem:[#allocation2 + $0xd0] sm:$0xff] %v2025
          %2090 = vst [vmem:[#allocation2 + $0xd8] sm:$0xff] %v2026
          %2091 = vst [vmem:[#allocation2 + $0xe0] sm:$0xff] %v2027
          %2092 = vst [vmem:[#allocation2 + $0xe8] sm:$0xff] %v2028
          %2093 = vst [vmem:[#allocation2 + $0xf0] sm:$0xff] %v2029
          %2094 = vst [vmem:[#allocation2 + $0xf8] sm:$0xff] %v2030
          %2095 = vst [vmem:[#allocation2 + $0x100] sm:$0xff] %v2031
          %2096 = vst [vmem:[#allocation2 + $0x108] sm:$0xff] %v2032
          %2097 = vst [vmem:[#allocation2 + $0x110] sm:$0xff] %v2033
          %2098 = vst [vmem:[#allocation2 + $0x118] sm:$0xff] %v2034
          %2099 = vst [vmem:[#allocation2 + $0x120] sm:$0xff] %v2035
          %2100 = vst [vmem:[#allocation2 + $0x128] sm:$0xff] %v2036
          %2101 = vst [vmem:[#allocation2 + $0x130] sm:$0xff] %v2037
          %2102 = vst [vmem:[#allocation2 + $0x138] sm:$0xff] %v2038
          %2103 = vst [vmem:[#allocation2 + $0x140] sm:$0xff] %v2039
          %2104 = vst [vmem:[#allocation2 + $0x148] sm:$0xff] %v2040
          %2105 = vst [vmem:[#allocation2 + $0x150] sm:$0xff] %v2041
          %2106 = vst [vmem:[#allocation2 + $0x158] sm:$0xff] %v2042
          %2107 = vst [vmem:[#allocation2 + $0x160] sm:$0xff] %v2043
          %2108 = vst [vmem:[#allocation2 + $0x168] sm:$0xff] %v2044
          %2109 = vst [vmem:[#allocation2 + $0x170] sm:$0xff] %v2045
          %2110 = vst [vmem:[#allocation2 + $0x178] sm:$0xff] %v2046
          %2111 = vst [vmem:[#allocation2 + $0x180] sm:$0xff] %v2047
          %2112 = vst [vmem:[#allocation2 + $0x188] sm:$0xff] %v2048
          %2113 = vst [vmem:[#allocation2 + $0x190] sm:$0xff] %v2049
          %2114 = vst [vmem:[#allocation2 + $0x198] sm:$0xff] %v2050
          %2115 = vst [vmem:[#allocation2 + $0x1a0] sm:$0xff] %v2051
          %2116 = vst [vmem:[#allocation2 + $0x1a8] sm:$0xff] %v2052
          %2117 = vst [vmem:[#allocation2 + $0x1b0] sm:$0xff] %v2053
          %2118 = vst [vmem:[#allocation2 + $0x1b8] sm:$0xff] %v2054
          %2119 = vst [vmem:[#allocation2 + $0x1c0] sm:$0xff] %v2055
          %2120 = vst [vmem:[#allocation2 + $0x1c8] sm:$0xff] %v2056
          %2121 = vst [vmem:[#allocation2 + $0x1d0] sm:$0xff] %v2057
          %2122 = vst [vmem:[#allocation2 + $0x1d8] sm:$0xff] %v2058
          %2123 = vst [vmem:[#allocation2 + $0x1e0] sm:$0xff] %v2059
          %2124 = vst [vmem:[#allocation2 + $0x1e8] sm:$0xff] %v2060
          %2125 = vst [vmem:[#allocation2 + $0x1f0] sm:$0xff] %v2061
          %2126 = vst [vmem:[#allocation2 + $0x1f8] sm:$0xff] %v2062
        $region44: #{tpu_custom_call.1} parent=35 // pred_fallthru
          _
        %v2127 = vld [vmem:[%s266] sm:$0xff]
        %v2128 = vld [vmem:[%s266 + $0x8] sm:$0xff]
        %v2129 = vld [vmem:[%s266 + $0x10] sm:$0xff]
        %v2130 = vld [vmem:[%s266 + $0x18] sm:$0xff]
        %v2131 = vld [vmem:[%s266 + $0x20] sm:$0xff]
        %v2132 = vld [vmem:[%s266 + $0x28] sm:$0xff]
        %v2133 = vld [vmem:[%s266 + $0x30] sm:$0xff]
        %v2134 = vld [vmem:[%s266 + $0x38] sm:$0xff]
        %v2135 = vld [vmem:[%s266 + $0x40] sm:$0xff]
        %v2136 = vld [vmem:[%s266 + $0x48] sm:$0xff]
        %v2137 = vld [vmem:[%s266 + $0x50] sm:$0xff]
        %v2138 = vld [vmem:[%s266 + $0x58] sm:$0xff]
        %v2139 = vld [vmem:[%s266 + $0x60] sm:$0xff]
        %v2140 = vld [vmem:[%s266 + $0x68] sm:$0xff]
        %v2141 = vld [vmem:[%s266 + $0x70] sm:$0xff]
        %v2142 = vld [vmem:[%s266 + $0x78] sm:$0xff]
        %v2143 = vld [vmem:[%s266 + $0x80] sm:$0xff]
        %v2144 = vld [vmem:[%s266 + $0x88] sm:$0xff]
        %v2145 = vld [vmem:[%s266 + $0x90] sm:$0xff]
        %v2146 = vld [vmem:[%s266 + $0x98] sm:$0xff]
        %v2147 = vld [vmem:[%s266 + $0xa0] sm:$0xff]
        %v2148 = vld [vmem:[%s266 + $0xa8] sm:$0xff]
        %v2149 = vld [vmem:[%s266 + $0xb0] sm:$0xff]
        %v2150 = vld [vmem:[%s266 + $0xb8] sm:$0xff]
        %v2151 = vld [vmem:[%s266 + $0xc0] sm:$0xff]
        %v2152 = vld [vmem:[%s266 + $0xc8] sm:$0xff]
        %v2153 = vld [vmem:[%s266 + $0xd0] sm:$0xff]
        %v2154 = vld [vmem:[%s266 + $0xd8] sm:$0xff]
        %v2155 = vld [vmem:[%s266 + $0xe0] sm:$0xff]
        %v2156 = vld [vmem:[%s266 + $0xe8] sm:$0xff]
        %v2157 = vld [vmem:[%s266 + $0xf0] sm:$0xff]
        %v2158 = vld [vmem:[%s266 + $0xf8] sm:$0xff]
        %v2159 = vld [vmem:[%s266 + $0x100] sm:$0xff]
        %v2160 = vld [vmem:[%s266 + $0x108] sm:$0xff]
        %v2161 = vld [vmem:[%s266 + $0x110] sm:$0xff]
        %v2162 = vld [vmem:[%s266 + $0x118] sm:$0xff]
        %v2163 = vld [vmem:[%s266 + $0x120] sm:$0xff]
        %v2164 = vld [vmem:[%s266 + $0x128] sm:$0xff]
        %v2165 = vld [vmem:[%s266 + $0x130] sm:$0xff]
        %v2166 = vld [vmem:[%s266 + $0x138] sm:$0xff]
        %v2167 = vld [vmem:[%s266 + $0x140] sm:$0xff]
        %v2168 = vld [vmem:[%s266 + $0x148] sm:$0xff]
        %v2169 = vld [vmem:[%s266 + $0x150] sm:$0xff]
        %v2170 = vld [vmem:[%s266 + $0x158] sm:$0xff]
        %v2171 = vld [vmem:[%s266 + $0x160] sm:$0xff]
        %v2172 = vld [vmem:[%s266 + $0x168] sm:$0xff]
        %v2173 = vld [vmem:[%s266 + $0x170] sm:$0xff]
        %v2174 = vld [vmem:[%s266 + $0x178] sm:$0xff]
        %v2175 = vld [vmem:[%s266 + $0x180] sm:$0xff]
        %v2176 = vld [vmem:[%s266 + $0x188] sm:$0xff]
        %v2177 = vld [vmem:[%s266 + $0x190] sm:$0xff]
        %v2178 = vld [vmem:[%s266 + $0x198] sm:$0xff]
        %v2179 = vld [vmem:[%s266 + $0x1a0] sm:$0xff]
        %v2180 = vld [vmem:[%s266 + $0x1a8] sm:$0xff]
        %v2181 = vld [vmem:[%s266 + $0x1b0] sm:$0xff]
        %v2182 = vld [vmem:[%s266 + $0x1b8] sm:$0xff]
        %v2183 = vld [vmem:[%s266 + $0x1c0] sm:$0xff]
        %v2184 = vld [vmem:[%s266 + $0x1c8] sm:$0xff]
        %v2185 = vld [vmem:[%s266 + $0x1d0] sm:$0xff]
        %v2186 = vld [vmem:[%s266 + $0x1d8] sm:$0xff]
        %v2187 = vld [vmem:[%s266 + $0x1e0] sm:$0xff]
        %v2188 = vld [vmem:[%s266 + $0x1e8] sm:$0xff]
        %v2189 = vld [vmem:[%s266 + $0x1f0] sm:$0xff]
        %v2190 = vld [vmem:[%s266 + $0x1f8] sm:$0xff]
        %v2191 = vld [vmem:[#allocation2] sm:$0xff]
        %v2192 = vld [vmem:[#allocation2 + $0x8] sm:$0xff]
        %v2193 = vld [vmem:[#allocation2 + $0x10] sm:$0xff]
        %v2194 = vld [vmem:[#allocation2 + $0x18] sm:$0xff]
        %v2195 = vld [vmem:[#allocation2 + $0x20] sm:$0xff]
        %v2196 = vld [vmem:[#allocation2 + $0x28] sm:$0xff]
        %v2197 = vld [vmem:[#allocation2 + $0x30] sm:$0xff]
        %v2198 = vld [vmem:[#allocation2 + $0x38] sm:$0xff]
        %v2199 = vld [vmem:[#allocation2 + $0x40] sm:$0xff]
        %v2200 = vld [vmem:[#allocation2 + $0x48] sm:$0xff]
        %v2201 = vld [vmem:[#allocation2 + $0x50] sm:$0xff]
        %v2202 = vld [vmem:[#allocation2 + $0x58] sm:$0xff]
        %v2203 = vld [vmem:[#allocation2 + $0x60] sm:$0xff]
        %v2204 = vld [vmem:[#allocation2 + $0x68] sm:$0xff]
        %v2205 = vld [vmem:[#allocation2 + $0x70] sm:$0xff]
        %v2206 = vld [vmem:[#allocation2 + $0x78] sm:$0xff]
        %v2207 = vld [vmem:[#allocation2 + $0x80] sm:$0xff]
        %v2208 = vld [vmem:[#allocation2 + $0x88] sm:$0xff]
        %v2209 = vld [vmem:[#allocation2 + $0x90] sm:$0xff]
        %v2210 = vld [vmem:[#allocation2 + $0x98] sm:$0xff]
        %v2211 = vld [vmem:[#allocation2 + $0xa0] sm:$0xff]
        %v2212 = vld [vmem:[#allocation2 + $0xa8] sm:$0xff]
        %v2213 = vld [vmem:[#allocation2 + $0xb0] sm:$0xff]
        %v2214 = vld [vmem:[#allocation2 + $0xb8] sm:$0xff]
        %v2215 = vld [vmem:[#allocation2 + $0xc0] sm:$0xff]
        %v2216 = vld [vmem:[#allocation2 + $0xc8] sm:$0xff]
        %v2217 = vld [vmem:[#allocation2 + $0xd0] sm:$0xff]
        %v2218 = vld [vmem:[#allocation2 + $0xd8] sm:$0xff]
        %v2219 = vld [vmem:[#allocation2 + $0xe0] sm:$0xff]
        %v2220 = vld [vmem:[#allocation2 + $0xe8] sm:$0xff]
        %v2221 = vld [vmem:[#allocation2 + $0xf0] sm:$0xff]
        %v2222 = vld [vmem:[#allocation2 + $0xf8] sm:$0xff]
        %v2223 = vld [vmem:[#allocation2 + $0x100] sm:$0xff]
        %v2224 = vld [vmem:[#allocation2 + $0x108] sm:$0xff]
        %v2225 = vld [vmem:[#allocation2 + $0x110] sm:$0xff]
        %v2226 = vld [vmem:[#allocation2 + $0x118] sm:$0xff]
        %v2227 = vld [vmem:[#allocation2 + $0x120] sm:$0xff]
        %v2228 = vld [vmem:[#allocation2 + $0x128] sm:$0xff]
        %v2229 = vld [vmem:[#allocation2 + $0x130] sm:$0xff]
        %v2230 = vld [vmem:[#allocation2 + $0x138] sm:$0xff]
        %v2231 = vld [vmem:[#allocation2 + $0x140] sm:$0xff]
        %v2232 = vld [vmem:[#allocation2 + $0x148] sm:$0xff]
        %v2233 = vld [vmem:[#allocation2 + $0x150] sm:$0xff]
        %v2234 = vld [vmem:[#allocation2 + $0x158] sm:$0xff]
        %v2235 = vld [vmem:[#allocation2 + $0x160] sm:$0xff]
        %v2236 = vld [vmem:[#allocation2 + $0x168] sm:$0xff]
        %v2237 = vld [vmem:[#allocation2 + $0x170] sm:$0xff]
        %v2238 = vld [vmem:[#allocation2 + $0x178] sm:$0xff]
        %v2239 = vld [vmem:[#allocation2 + $0x180] sm:$0xff]
        %v2240 = vld [vmem:[#allocation2 + $0x188] sm:$0xff]
        %v2241 = vld [vmem:[#allocation2 + $0x190] sm:$0xff]
        %v2242 = vld [vmem:[#allocation2 + $0x198] sm:$0xff]
        %v2243 = vld [vmem:[#allocation2 + $0x1a0] sm:$0xff]
        %v2244 = vld [vmem:[#allocation2 + $0x1a8] sm:$0xff]
        %v2245 = vld [vmem:[#allocation2 + $0x1b0] sm:$0xff]
        %v2246 = vld [vmem:[#allocation2 + $0x1b8] sm:$0xff]
        %v2247 = vld [vmem:[#allocation2 + $0x1c0] sm:$0xff]
        %v2248 = vld [vmem:[#allocation2 + $0x1c8] sm:$0xff]
        %v2249 = vld [vmem:[#allocation2 + $0x1d0] sm:$0xff]
        %v2250 = vld [vmem:[#allocation2 + $0x1d8] sm:$0xff]
        %v2251 = vld [vmem:[#allocation2 + $0x1e0] sm:$0xff]
        %v2252 = vld [vmem:[#allocation2 + $0x1e8] sm:$0xff]
        %v2253 = vld [vmem:[#allocation2 + $0x1f0] sm:$0xff]
        %v2254 = vld [vmem:[#allocation2 + $0x1f8] sm:$0xff]
        %v2255 = vmul.f32 %v2127, %v2191
        %v2256 = vmul.f32 %v2128, %v2192
        %v2257 = vmul.f32 %v2129, %v2193
        %v2258 = vmul.f32 %v2130, %v2194
        %v2259 = vmul.f32 %v2131, %v2195
        %v2260 = vmul.f32 %v2132, %v2196
        %v2261 = vmul.f32 %v2133, %v2197
        %v2262 = vmul.f32 %v2134, %v2198
        %v2263 = vmul.f32 %v2135, %v2199
        %v2264 = vmul.f32 %v2136, %v2200
        %v2265 = vmul.f32 %v2137, %v2201
        %v2266 = vmul.f32 %v2138, %v2202
        %v2267 = vmul.f32 %v2139, %v2203
        %v2268 = vmul.f32 %v2140, %v2204
        %v2269 = vmul.f32 %v2141, %v2205
        %v2270 = vmul.f32 %v2142, %v2206
        %v2271 = vmul.f32 %v2143, %v2207
        %v2272 = vmul.f32 %v2144, %v2208
        %v2273 = vmul.f32 %v2145, %v2209
        %v2274 = vmul.f32 %v2146, %v2210
        %v2275 = vmul.f32 %v2147, %v2211
        %v2276 = vmul.f32 %v2148, %v2212
        %v2277 = vmul.f32 %v2149, %v2213
        %v2278 = vmul.f32 %v2150, %v2214
        %v2279 = vmul.f32 %v2151, %v2215
        %v2280 = vmul.f32 %v2152, %v2216
        %v2281 = vmul.f32 %v2153, %v2217
        %v2282 = vmul.f32 %v2154, %v2218
        %v2283 = vmul.f32 %v2155, %v2219
        %v2284 = vmul.f32 %v2156, %v2220
        %v2285 = vmul.f32 %v2157, %v2221
        %v2286 = vmul.f32 %v2158, %v2222
        %v2287 = vmul.f32 %v2159, %v2223
        %v2288 = vmul.f32 %v2160, %v2224
        %v2289 = vmul.f32 %v2161, %v2225
        %v2290 = vmul.f32 %v2162, %v2226
        %v2291 = vmul.f32 %v2163, %v2227
        %v2292 = vmul.f32 %v2164, %v2228
        %v2293 = vmul.f32 %v2165, %v2229
        %v2294 = vmul.f32 %v2166, %v2230
        %v2295 = vmul.f32 %v2167, %v2231
        %v2296 = vmul.f32 %v2168, %v2232
        %v2297 = vmul.f32 %v2169, %v2233
        %v2298 = vmul.f32 %v2170, %v2234
        %v2299 = vmul.f32 %v2171, %v2235
        %v2300 = vmul.f32 %v2172, %v2236
        %v2301 = vmul.f32 %v2173, %v2237
        %v2302 = vmul.f32 %v2174, %v2238
        %v2303 = vmul.f32 %v2175, %v2239
        %v2304 = vmul.f32 %v2176, %v2240
        %v2305 = vmul.f32 %v2177, %v2241
        %v2306 = vmul.f32 %v2178, %v2242
        %v2307 = vmul.f32 %v2179, %v2243
        %v2308 = vmul.f32 %v2180, %v2244
        %v2309 = vmul.f32 %v2181, %v2245
        %v2310 = vmul.f32 %v2182, %v2246
        %v2311 = vmul.f32 %v2183, %v2247
        %v2312 = vmul.f32 %v2184, %v2248
        %v2313 = vmul.f32 %v2185, %v2249
        %v2314 = vmul.f32 %v2186, %v2250
        %v2315 = vmul.f32 %v2187, %v2251
        %v2316 = vmul.f32 %v2188, %v2252
        %v2317 = vmul.f32 %v2189, %v2253
        %v2318 = vmul.f32 %v2190, %v2254
        %2319 = vst [vmem:[%s302] sm:$0xff] %v2255
        %2320 = vst [vmem:[%s302 + $0x8] sm:$0xff] %v2256
        %2321 = vst [vmem:[%s302 + $0x10] sm:$0xff] %v2257
        %2322 = vst [vmem:[%s302 + $0x18] sm:$0xff] %v2258
        %2323 = vst [vmem:[%s302 + $0x20] sm:$0xff] %v2259
        %2324 = vst [vmem:[%s302 + $0x28] sm:$0xff] %v2260
        %2325 = vst [vmem:[%s302 + $0x30] sm:$0xff] %v2261
        %2326 = vst [vmem:[%s302 + $0x38] sm:$0xff] %v2262
        %2327 = vst [vmem:[%s302 + $0x40] sm:$0xff] %v2263
        %2328 = vst [vmem:[%s302 + $0x48] sm:$0xff] %v2264
        %2329 = vst [vmem:[%s302 + $0x50] sm:$0xff] %v2265
        %2330 = vst [vmem:[%s302 + $0x58] sm:$0xff] %v2266
        %2331 = vst [vmem:[%s302 + $0x60] sm:$0xff] %v2267
        %2332 = vst [vmem:[%s302 + $0x68] sm:$0xff] %v2268
        %2333 = vst [vmem:[%s302 + $0x70] sm:$0xff] %v2269
        %2334 = vst [vmem:[%s302 + $0x78] sm:$0xff] %v2270
        %2335 = vst [vmem:[%s302 + $0x80] sm:$0xff] %v2271
        %2336 = vst [vmem:[%s302 + $0x88] sm:$0xff] %v2272
        %2337 = vst [vmem:[%s302 + $0x90] sm:$0xff] %v2273
        %2338 = vst [vmem:[%s302 + $0x98] sm:$0xff] %v2274
        %2339 = vst [vmem:[%s302 + $0xa0] sm:$0xff] %v2275
        %2340 = vst [vmem:[%s302 + $0xa8] sm:$0xff] %v2276
        %2341 = vst [vmem:[%s302 + $0xb0] sm:$0xff] %v2277
        %2342 = vst [vmem:[%s302 + $0xb8] sm:$0xff] %v2278
        %2343 = vst [vmem:[%s302 + $0xc0] sm:$0xff] %v2279
        %2344 = vst [vmem:[%s302 + $0xc8] sm:$0xff] %v2280
        %2345 = vst [vmem:[%s302 + $0xd0] sm:$0xff] %v2281
        %2346 = vst [vmem:[%s302 + $0xd8] sm:$0xff] %v2282
        %2347 = vst [vmem:[%s302 + $0xe0] sm:$0xff] %v2283
        %2348 = vst [vmem:[%s302 + $0xe8] sm:$0xff] %v2284
        %2349 = vst [vmem:[%s302 + $0xf0] sm:$0xff] %v2285
        %2350 = vst [vmem:[%s302 + $0xf8] sm:$0xff] %v2286
        %2351 = vst [vmem:[%s302 + $0x100] sm:$0xff] %v2287
        %2352 = vst [vmem:[%s302 + $0x108] sm:$0xff] %v2288
        %2353 = vst [vmem:[%s302 + $0x110] sm:$0xff] %v2289
        %2354 = vst [vmem:[%s302 + $0x118] sm:$0xff] %v2290
        %2355 = vst [vmem:[%s302 + $0x120] sm:$0xff] %v2291
        %2356 = vst [vmem:[%s302 + $0x128] sm:$0xff] %v2292
        %2357 = vst [vmem:[%s302 + $0x130] sm:$0xff] %v2293
        %2358 = vst [vmem:[%s302 + $0x138] sm:$0xff] %v2294
        %2359 = vst [vmem:[%s302 + $0x140] sm:$0xff] %v2295
        %2360 = vst [vmem:[%s302 + $0x148] sm:$0xff] %v2296
        %2361 = vst [vmem:[%s302 + $0x150] sm:$0xff] %v2297
        %2362 = vst [vmem:[%s302 + $0x158] sm:$0xff] %v2298
        %2363 = vst [vmem:[%s302 + $0x160] sm:$0xff] %v2299
        %2364 = vst [vmem:[%s302 + $0x168] sm:$0xff] %v2300
        %2365 = vst [vmem:[%s302 + $0x170] sm:$0xff] %v2301
        %2366 = vst [vmem:[%s302 + $0x178] sm:$0xff] %v2302
        %2367 = vst [vmem:[%s302 + $0x180] sm:$0xff] %v2303
        %2368 = vst [vmem:[%s302 + $0x188] sm:$0xff] %v2304
        %2369 = vst [vmem:[%s302 + $0x190] sm:$0xff] %v2305
        %2370 = vst [vmem:[%s302 + $0x198] sm:$0xff] %v2306
        %2371 = vst [vmem:[%s302 + $0x1a0] sm:$0xff] %v2307
        %2372 = vst [vmem:[%s302 + $0x1a8] sm:$0xff] %v2308
        %2373 = vst [vmem:[%s302 + $0x1b0] sm:$0xff] %v2309
        %2374 = vst [vmem:[%s302 + $0x1b8] sm:$0xff] %v2310
        %2375 = vst [vmem:[%s302 + $0x1c0] sm:$0xff] %v2311
        %2376 = vst [vmem:[%s302 + $0x1c8] sm:$0xff] %v2312
        %2377 = vst [vmem:[%s302 + $0x1d0] sm:$0xff] %v2313
        %2378 = vst [vmem:[%s302 + $0x1d8] sm:$0xff] %v2314
        %2379 = vst [vmem:[%s302 + $0x1e0] sm:$0xff] %v2315
        %2380 = vst [vmem:[%s302 + $0x1e8] sm:$0xff] %v2316
        %2381 = vst [vmem:[%s302 + $0x1f0] sm:$0xff] %v2317
        %2382 = vst [vmem:[%s302 + $0x1f8] sm:$0xff] %v2318
        %v2383 = vld [vmem:[%s322] sm:$0xff]
        %v2384 = vld [vmem:[%s322 + $0x8] sm:$0xff]
        %v2385 = vld [vmem:[%s322 + $0x10] sm:$0xff]
        %v2386 = vld [vmem:[%s322 + $0x18] sm:$0xff]
        %v2387 = vld [vmem:[%s322 + $0x20] sm:$0xff]
        %v2388 = vld [vmem:[%s322 + $0x28] sm:$0xff]
        %v2389 = vld [vmem:[%s322 + $0x30] sm:$0xff]
        %v2390 = vld [vmem:[%s322 + $0x38] sm:$0xff]
        %v2391 = vld [vmem:[%s322 + $0x40] sm:$0xff]
        %v2392 = vld [vmem:[%s322 + $0x48] sm:$0xff]
        %v2393 = vld [vmem:[%s322 + $0x50] sm:$0xff]
        %v2394 = vld [vmem:[%s322 + $0x58] sm:$0xff]
        %v2395 = vld [vmem:[%s322 + $0x60] sm:$0xff]
        %v2396 = vld [vmem:[%s322 + $0x68] sm:$0xff]
        %v2397 = vld [vmem:[%s322 + $0x70] sm:$0xff]
        %v2398 = vld [vmem:[%s322 + $0x78] sm:$0xff]
        %v2399 = vld [vmem:[%s322 + $0x80] sm:$0xff]
        %v2400 = vld [vmem:[%s322 + $0x88] sm:$0xff]
        %v2401 = vld [vmem:[%s322 + $0x90] sm:$0xff]
        %v2402 = vld [vmem:[%s322 + $0x98] sm:$0xff]
        %v2403 = vld [vmem:[%s322 + $0xa0] sm:$0xff]
        %v2404 = vld [vmem:[%s322 + $0xa8] sm:$0xff]
        %v2405 = vld [vmem:[%s322 + $0xb0] sm:$0xff]
        %v2406 = vld [vmem:[%s322 + $0xb8] sm:$0xff]
        %v2407 = vld [vmem:[%s322 + $0xc0] sm:$0xff]
        %v2408 = vld [vmem:[%s322 + $0xc8] sm:$0xff]
        %v2409 = vld [vmem:[%s322 + $0xd0] sm:$0xff]
        %v2410 = vld [vmem:[%s322 + $0xd8] sm:$0xff]
        %v2411 = vld [vmem:[%s322 + $0xe0] sm:$0xff]
        %v2412 = vld [vmem:[%s322 + $0xe8] sm:$0xff]
        %v2413 = vld [vmem:[%s322 + $0xf0] sm:$0xff]
        %v2414 = vld [vmem:[%s322 + $0xf8] sm:$0xff]
        %v2415 = vld [vmem:[%s3] sm:$0xff]
        %v2416 = vld [vmem:[%s3 + $0x8] sm:$0xff]
        %v2417 = vld [vmem:[%s3 + $0x10] sm:$0xff]
        %v2418 = vld [vmem:[%s3 + $0x18] sm:$0xff]
        %vm2419 = vcmask 261120
        %v2421 = vsel %vm2419, %v2383, 0
        %v2424 = vsel %vm2419, %v2384, 0
        %v2427 = vsel %vm2419, %v2385, 0
        %v2430 = vsel %vm2419, %v2386, 0
        %v2433 = vsel %vm2419, %v2387, 0
        %v2436 = vsel %vm2419, %v2388, 0
        %v2439 = vsel %vm2419, %v2389, 0
        %v2442 = vsel %vm2419, %v2390, 0
        %v2445 = vsel %vm2419, %v2391, 0
        %v2448 = vsel %vm2419, %v2392, 0
        %v2451 = vsel %vm2419, %v2393, 0
        %v2454 = vsel %vm2419, %v2394, 0
        %v2457 = vsel %vm2419, %v2395, 0
        %v2460 = vsel %vm2419, %v2396, 0
        %v2463 = vsel %vm2419, %v2397, 0
        %v2466 = vsel %vm2419, %v2398, 0
        %v2469 = vsel %vm2419, %v2399, 0
        %v2472 = vsel %vm2419, %v2400, 0
        %v2475 = vsel %vm2419, %v2401, 0
        %v2478 = vsel %vm2419, %v2402, 0
        %v2481 = vsel %vm2419, %v2403, 0
        %v2484 = vsel %vm2419, %v2404, 0
        %v2487 = vsel %vm2419, %v2405, 0
        %v2490 = vsel %vm2419, %v2406, 0
        %v2493 = vsel %vm2419, %v2407, 0
        %v2496 = vsel %vm2419, %v2408, 0
        %v2499 = vsel %vm2419, %v2409, 0
        %v2502 = vsel %vm2419, %v2410, 0
        %v2505 = vsel %vm2419, %v2411, 0
        %v2508 = vsel %vm2419, %v2412, 0
        %v2511 = vsel %vm2419, %v2413, 0
        %v2514 = vsel %vm2419, %v2414, 0
        %2516 = vmatpush.msra.mxu0 0.0
        %2517 = vmatpush.msra.mxu0 0.0
        %2518 = vmatpush.msra.mxu0 0.0
        %2519 = vmatpush.msra.mxu0 0.0
        %2520 = vmatpush.msra.mxu0 0.0
        %2521 = vmatpush.msra.mxu0 0.0
        %2522 = vmatpush.msra.mxu0 0.0
        %2523 = vmatpush.msra.mxu0 0.0
        %2524 = vmatpush.msra.mxu0 0.0
        %2525 = vmatpush.msra.mxu0 0.0
        %2526 = vmatpush.msra.mxu0 0.0
        %2527 = vmatpush.msra.mxu0 0.0
        %2528 = vmatpush.msra.mxu0 %v2418
        %2529 = vmatpush.msra.mxu0 %v2417
        %2530 = vmatpush.msra.mxu0 %v2416
        %2531 = vmatpush.msra.mxu0 %v2415
        %2532 = vmatmul.f32.gmra.mxu0 %v2421
        %v2533 = vpop.f32.mrf.mxu0
        %v2534 = vadd.f32 0.0, %v2533
        %2535 = vmatmul.f32.gmra.mxu0 %v2424
        %v2536 = vpop.f32.mrf.mxu0
        %v2537 = vadd.f32 0.0, %v2536
        %2538 = vmatmul.f32.gmra.mxu0 %v2427
        %v2539 = vpop.f32.mrf.mxu0
        %v2540 = vadd.f32 0.0, %v2539
        %2541 = vmatmul.f32.gmra.mxu0 %v2430
        %v2542 = vpop.f32.mrf.mxu0
        %v2543 = vadd.f32 0.0, %v2542
        %2544 = vmatmul.f32.gmra.mxu0 %v2433
        %v2545 = vpop.f32.mrf.mxu0
        %v2546 = vadd.f32 0.0, %v2545
        %2547 = vmatmul.f32.gmra.mxu0 %v2436
        %v2548 = vpop.f32.mrf.mxu0
        %v2549 = vadd.f32 0.0, %v2548
        %2550 = vmatmul.f32.gmra.mxu0 %v2439
        %v2551 = vpop.f32.mrf.mxu0
        %v2552 = vadd.f32 0.0, %v2551
        %2553 = vmatmul.f32.gmra.mxu0 %v2442
        %v2554 = vpop.f32.mrf.mxu0
        %v2555 = vadd.f32 0.0, %v2554
        %2556 = vmatmul.f32.gmra.mxu0 %v2445
        %v2557 = vpop.f32.mrf.mxu0
        %v2558 = vadd.f32 0.0, %v2557
        %2559 = vmatmul.f32.gmra.mxu0 %v2448
        %v2560 = vpop.f32.mrf.mxu0
        %v2561 = vadd.f32 0.0, %v2560
        %2562 = vmatmul.f32.gmra.mxu0 %v2451
        %v2563 = vpop.f32.mrf.mxu0
        %v2564 = vadd.f32 0.0, %v2563
        %2565 = vmatmul.f32.gmra.mxu0 %v2454
        %v2566 = vpop.f32.mrf.mxu0
        %v2567 = vadd.f32 0.0, %v2566
        %2568 = vmatmul.f32.gmra.mxu0 %v2457
        %v2569 = vpop.f32.mrf.mxu0
        %v2570 = vadd.f32 0.0, %v2569
        %2571 = vmatmul.f32.gmra.mxu0 %v2460
        %v2572 = vpop.f32.mrf.mxu0
        %v2573 = vadd.f32 0.0, %v2572
        %2574 = vmatmul.f32.gmra.mxu0 %v2463
        %v2575 = vpop.f32.mrf.mxu0
        %v2576 = vadd.f32 0.0, %v2575
        %2577 = vmatmul.f32.gmra.mxu0 %v2466
        %v2578 = vpop.f32.mrf.mxu0
        %v2579 = vadd.f32 0.0, %v2578
        %2580 = vmatmul.f32.gmra.mxu0 %v2469
        %v2581 = vpop.f32.mrf.mxu0
        %v2582 = vadd.f32 0.0, %v2581
        %2583 = vmatmul.f32.gmra.mxu0 %v2472
        %v2584 = vpop.f32.mrf.mxu0
        %v2585 = vadd.f32 0.0, %v2584
        %2586 = vmatmul.f32.gmra.mxu0 %v2475
        %v2587 = vpop.f32.mrf.mxu0
        %v2588 = vadd.f32 0.0, %v2587
        %2589 = vmatmul.f32.gmra.mxu0 %v2478
        %v2590 = vpop.f32.mrf.mxu0
        %v2591 = vadd.f32 0.0, %v2590
        %2592 = vmatmul.f32.gmra.mxu0 %v2481
        %v2593 = vpop.f32.mrf.mxu0
        %v2594 = vadd.f32 0.0, %v2593
        %2595 = vmatmul.f32.gmra.mxu0 %v2484
        %v2596 = vpop.f32.mrf.mxu0
        %v2597 = vadd.f32 0.0, %v2596
        %2598 = vmatmul.f32.gmra.mxu0 %v2487
        %v2599 = vpop.f32.mrf.mxu0
        %v2600 = vadd.f32 0.0, %v2599
        %2601 = vmatmul.f32.gmra.mxu0 %v2490
        %v2602 = vpop.f32.mrf.mxu0
        %v2603 = vadd.f32 0.0, %v2602
        %2604 = vmatmul.f32.gmra.mxu0 %v2493
        %v2605 = vpop.f32.mrf.mxu0
        %v2606 = vadd.f32 0.0, %v2605
        %2607 = vmatmul.f32.gmra.mxu0 %v2496
        %v2608 = vpop.f32.mrf.mxu0
        %v2609 = vadd.f32 0.0, %v2608
        %2610 = vmatmul.f32.gmra.mxu0 %v2499
        %v2611 = vpop.f32.mrf.mxu0
        %v2612 = vadd.f32 0.0, %v2611
        %2613 = vmatmul.f32.gmra.mxu0 %v2502
        %v2614 = vpop.f32.mrf.mxu0
        %v2615 = vadd.f32 0.0, %v2614
        %2616 = vmatmul.f32.gmra.mxu0 %v2505
        %v2617 = vpop.f32.mrf.mxu0
        %v2618 = vadd.f32 0.0, %v2617
        %2619 = vmatmul.f32.gmra.mxu0 %v2508
        %v2620 = vpop.f32.mrf.mxu0
        %v2621 = vadd.f32 0.0, %v2620
        %2622 = vmatmul.f32.gmra.mxu0 %v2511
        %v2623 = vpop.f32.mrf.mxu0
        %v2624 = vadd.f32 0.0, %v2623
        %2625 = vmatmul.f32.gmra.mxu0 %v2514
        %v2626 = vpop.f32.mrf.mxu0
        %v2627 = vadd.f32 0.0, %v2626
        %2628 = vdwg.mxu0
        %2629 = vmatpush.msra.mxu0 %v2579
        %2630 = vmatpush.msra.mxu0 %v2576
        %2631 = vmatpush.msra.mxu0 %v2573
        %2632 = vmatpush.msra.mxu0 %v2570
        %2633 = vmatpush.msra.mxu0 %v2567
        %2634 = vmatpush.msra.mxu0 %v2564
        %2635 = vmatpush.msra.mxu0 %v2561
        %2636 = vmatpush.msra.mxu0 %v2558
        %2637 = vmatpush.msra.mxu0 %v2555
        %2638 = vmatpush.msra.mxu0 %v2552
        %2639 = vmatpush.msra.mxu0 %v2549
        %2640 = vmatpush.msra.mxu0 %v2546
        %2641 = vmatpush.msra.mxu0 %v2543
        %2642 = vmatpush.msra.mxu0 %v2540
        %2643 = vmatpush.msra.mxu0 %v2537
        %2644 = vmatpush.msra.mxu0 %v2534
        %2645 = vmatmul.f32.gmra.mxu0 %v2255
        %v2646 = vpop.f32.mrf.mxu0
        %v2647 = vadd.f32 0.0, %v2646
        %2648 = vmatmul.f32.gmra.mxu0 %v2257
        %v2649 = vpop.f32.mrf.mxu0
        %v2650 = vadd.f32 0.0, %v2649
        %2651 = vmatmul.f32.gmra.mxu0 %v2259
        %v2652 = vpop.f32.mrf.mxu0
        %v2653 = vadd.f32 0.0, %v2652
        %2654 = vmatmul.f32.gmra.mxu0 %v2261
        %v2655 = vpop.f32.mrf.mxu0
        %v2656 = vadd.f32 0.0, %v2655
        %2657 = vmatmul.f32.gmra.mxu0 %v2263
        %v2658 = vpop.f32.mrf.mxu0
        %v2659 = vadd.f32 0.0, %v2658
        %2660 = vmatmul.f32.gmra.mxu0 %v2265
        %v2661 = vpop.f32.mrf.mxu0
        %v2662 = vadd.f32 0.0, %v2661
        %2663 = vmatmul.f32.gmra.mxu0 %v2267
        %v2664 = vpop.f32.mrf.mxu0
        %v2665 = vadd.f32 0.0, %v2664
        %2666 = vmatmul.f32.gmra.mxu0 %v2269
        %v2667 = vpop.f32.mrf.mxu0
        %v2668 = vadd.f32 0.0, %v2667
        %2669 = vmatmul.f32.gmra.mxu0 %v2271
        %v2670 = vpop.f32.mrf.mxu0
        %v2671 = vadd.f32 0.0, %v2670
        %2672 = vmatmul.f32.gmra.mxu0 %v2273
        %v2673 = vpop.f32.mrf.mxu0
        %v2674 = vadd.f32 0.0, %v2673
        %2675 = vmatmul.f32.gmra.mxu0 %v2275
        %v2676 = vpop.f32.mrf.mxu0
        %v2677 = vadd.f32 0.0, %v2676
        %2678 = vmatmul.f32.gmra.mxu0 %v2277
        %v2679 = vpop.f32.mrf.mxu0
        %v2680 = vadd.f32 0.0, %v2679
        %2681 = vmatmul.f32.gmra.mxu0 %v2279
        %v2682 = vpop.f32.mrf.mxu0
        %v2683 = vadd.f32 0.0, %v2682
        %2684 = vmatmul.f32.gmra.mxu0 %v2281
        %v2685 = vpop.f32.mrf.mxu0
        %v2686 = vadd.f32 0.0, %v2685
        %2687 = vmatmul.f32.gmra.mxu0 %v2283
        %v2688 = vpop.f32.mrf.mxu0
        %v2689 = vadd.f32 0.0, %v2688
        %2690 = vmatmul.f32.gmra.mxu0 %v2285
        %v2691 = vpop.f32.mrf.mxu0
        %v2692 = vadd.f32 0.0, %v2691
        %2693 = vmatmul.f32.gmra.mxu0 %v2287
        %v2694 = vpop.f32.mrf.mxu0
        %v2695 = vadd.f32 0.0, %v2694
        %2696 = vmatmul.f32.gmra.mxu0 %v2289
        %v2697 = vpop.f32.mrf.mxu0
        %v2698 = vadd.f32 0.0, %v2697
        %2699 = vmatmul.f32.gmra.mxu0 %v2291
        %v2700 = vpop.f32.mrf.mxu0
        %v2701 = vadd.f32 0.0, %v2700
        %2702 = vmatmul.f32.gmra.mxu0 %v2293
        %v2703 = vpop.f32.mrf.mxu0
        %v2704 = vadd.f32 0.0, %v2703
        %2705 = vmatmul.f32.gmra.mxu0 %v2295
        %v2706 = vpop.f32.mrf.mxu0
        %v2707 = vadd.f32 0.0, %v2706
        %2708 = vmatmul.f32.gmra.mxu0 %v2297
        %v2709 = vpop.f32.mrf.mxu0
        %v2710 = vadd.f32 0.0, %v2709
        %2711 = vmatmul.f32.gmra.mxu0 %v2299
        %v2712 = vpop.f32.mrf.mxu0
        %v2713 = vadd.f32 0.0, %v2712
        %2714 = vmatmul.f32.gmra.mxu0 %v2301
        %v2715 = vpop.f32.mrf.mxu0
        %v2716 = vadd.f32 0.0, %v2715
        %2717 = vmatmul.f32.gmra.mxu0 %v2303
        %v2718 = vpop.f32.mrf.mxu0
        %v2719 = vadd.f32 0.0, %v2718
        %2720 = vmatmul.f32.gmra.mxu0 %v2305
        %v2721 = vpop.f32.mrf.mxu0
        %v2722 = vadd.f32 0.0, %v2721
        %2723 = vmatmul.f32.gmra.mxu0 %v2307
        %v2724 = vpop.f32.mrf.mxu0
        %v2725 = vadd.f32 0.0, %v2724
        %2726 = vmatmul.f32.gmra.mxu0 %v2309
        %v2727 = vpop.f32.mrf.mxu0
        %v2728 = vadd.f32 0.0, %v2727
        %2729 = vmatmul.f32.gmra.mxu0 %v2311
        %v2730 = vpop.f32.mrf.mxu0
        %v2731 = vadd.f32 0.0, %v2730
        %2732 = vmatmul.f32.gmra.mxu0 %v2313
        %v2733 = vpop.f32.mrf.mxu0
        %v2734 = vadd.f32 0.0, %v2733
        %2735 = vmatmul.f32.gmra.mxu0 %v2315
        %v2736 = vpop.f32.mrf.mxu0
        %v2737 = vadd.f32 0.0, %v2736
        %2738 = vmatmul.f32.gmra.mxu0 %v2317
        %v2739 = vpop.f32.mrf.mxu0
        %v2740 = vadd.f32 0.0, %v2739
        %2741 = vdwg.mxu0
        %2742 = vmatpush.msra.mxu0 %v2627
        %2743 = vmatpush.msra.mxu0 %v2624
        %2744 = vmatpush.msra.mxu0 %v2621
        %2745 = vmatpush.msra.mxu0 %v2618
        %2746 = vmatpush.msra.mxu0 %v2615
        %2747 = vmatpush.msra.mxu0 %v2612
        %2748 = vmatpush.msra.mxu0 %v2609
        %2749 = vmatpush.msra.mxu0 %v2606
        %2750 = vmatpush.msra.mxu0 %v2603
        %2751 = vmatpush.msra.mxu0 %v2600
        %2752 = vmatpush.msra.mxu0 %v2597
        %2753 = vmatpush.msra.mxu0 %v2594
        %2754 = vmatpush.msra.mxu0 %v2591
        %2755 = vmatpush.msra.mxu0 %v2588
        %2756 = vmatpush.msra.mxu0 %v2585
        %2757 = vmatpush.msra.mxu0 %v2582
        %2758 = vmatmul.f32.gmra.mxu0 %v2256
        %v2759 = vpop.f32.mrf.mxu0
        %v2760 = vadd.f32 %v2647, %v2759
        %2761 = vmatmul.f32.gmra.mxu0 %v2258
        %v2762 = vpop.f32.mrf.mxu0
        %v2763 = vadd.f32 %v2650, %v2762
        %2764 = vmatmul.f32.gmra.mxu0 %v2260
        %v2765 = vpop.f32.mrf.mxu0
        %v2766 = vadd.f32 %v2653, %v2765
        %2767 = vmatmul.f32.gmra.mxu0 %v2262
        %v2768 = vpop.f32.mrf.mxu0
        %v2769 = vadd.f32 %v2656, %v2768
        %2770 = vmatmul.f32.gmra.mxu0 %v2264
        %v2771 = vpop.f32.mrf.mxu0
        %v2772 = vadd.f32 %v2659, %v2771
        %2773 = vmatmul.f32.gmra.mxu0 %v2266
        %v2774 = vpop.f32.mrf.mxu0
        %v2775 = vadd.f32 %v2662, %v2774
        %2776 = vmatmul.f32.gmra.mxu0 %v2268
        %v2777 = vpop.f32.mrf.mxu0
        %v2778 = vadd.f32 %v2665, %v2777
        %2779 = vmatmul.f32.gmra.mxu0 %v2270
        %v2780 = vpop.f32.mrf.mxu0
        %v2781 = vadd.f32 %v2668, %v2780
        %2782 = vmatmul.f32.gmra.mxu0 %v2272
        %v2783 = vpop.f32.mrf.mxu0
        %v2784 = vadd.f32 %v2671, %v2783
        %2785 = vmatmul.f32.gmra.mxu0 %v2274
        %v2786 = vpop.f32.mrf.mxu0
        %v2787 = vadd.f32 %v2674, %v2786
        %2788 = vmatmul.f32.gmra.mxu0 %v2276
        %v2789 = vpop.f32.mrf.mxu0
        %v2790 = vadd.f32 %v2677, %v2789
        %2791 = vmatmul.f32.gmra.mxu0 %v2278
        %v2792 = vpop.f32.mrf.mxu0
        %v2793 = vadd.f32 %v2680, %v2792
        %2794 = vmatmul.f32.gmra.mxu0 %v2280
        %v2795 = vpop.f32.mrf.mxu0
        %v2796 = vadd.f32 %v2683, %v2795
        %2797 = vmatmul.f32.gmra.mxu0 %v2282
        %v2798 = vpop.f32.mrf.mxu0
        %v2799 = vadd.f32 %v2686, %v2798
        %2800 = vmatmul.f32.gmra.mxu0 %v2284
        %v2801 = vpop.f32.mrf.mxu0
        %v2802 = vadd.f32 %v2689, %v2801
        %2803 = vmatmul.f32.gmra.mxu0 %v2286
        %v2804 = vpop.f32.mrf.mxu0
        %v2805 = vadd.f32 %v2692, %v2804
        %2806 = vmatmul.f32.gmra.mxu0 %v2288
        %v2807 = vpop.f32.mrf.mxu0
        %v2808 = vadd.f32 %v2695, %v2807
        %2809 = vmatmul.f32.gmra.mxu0 %v2290
        %v2810 = vpop.f32.mrf.mxu0
        %v2811 = vadd.f32 %v2698, %v2810
        %2812 = vmatmul.f32.gmra.mxu0 %v2292
        %v2813 = vpop.f32.mrf.mxu0
        %v2814 = vadd.f32 %v2701, %v2813
        %2815 = vmatmul.f32.gmra.mxu0 %v2294
        %v2816 = vpop.f32.mrf.mxu0
        %v2817 = vadd.f32 %v2704, %v2816
        %2818 = vmatmul.f32.gmra.mxu0 %v2296
        %v2819 = vpop.f32.mrf.mxu0
        %v2820 = vadd.f32 %v2707, %v2819
        %2821 = vmatmul.f32.gmra.mxu0 %v2298
        %v2822 = vpop.f32.mrf.mxu0
        %v2823 = vadd.f32 %v2710, %v2822
        %2824 = vmatmul.f32.gmra.mxu0 %v2300
        %v2825 = vpop.f32.mrf.mxu0
        %v2826 = vadd.f32 %v2713, %v2825
        %2827 = vmatmul.f32.gmra.mxu0 %v2302
        %v2828 = vpop.f32.mrf.mxu0
        %v2829 = vadd.f32 %v2716, %v2828
        %2830 = vmatmul.f32.gmra.mxu0 %v2304
        %v2831 = vpop.f32.mrf.mxu0
        %v2832 = vadd.f32 %v2719, %v2831
        %2833 = vmatmul.f32.gmra.mxu0 %v2306
        %v2834 = vpop.f32.mrf.mxu0
        %v2835 = vadd.f32 %v2722, %v2834
        %2836 = vmatmul.f32.gmra.mxu0 %v2308
        %v2837 = vpop.f32.mrf.mxu0
        %v2838 = vadd.f32 %v2725, %v2837
        %2839 = vmatmul.f32.gmra.mxu0 %v2310
        %v2840 = vpop.f32.mrf.mxu0
        %v2841 = vadd.f32 %v2728, %v2840
        %2842 = vmatmul.f32.gmra.mxu0 %v2312
        %v2843 = vpop.f32.mrf.mxu0
        %v2844 = vadd.f32 %v2731, %v2843
        %2845 = vmatmul.f32.gmra.mxu0 %v2314
        %v2846 = vpop.f32.mrf.mxu0
        %v2847 = vadd.f32 %v2734, %v2846
        %2848 = vmatmul.f32.gmra.mxu0 %v2316
        %v2849 = vpop.f32.mrf.mxu0
        %v2850 = vadd.f32 %v2737, %v2849
        %2851 = vmatmul.f32.gmra.mxu0 %v2318
        %v2852 = vpop.f32.mrf.mxu0
        %v2853 = vadd.f32 %v2740, %v2852
        %2854 = vdwg.mxu0
        %2855 = vst [vmem:[%s309] sm:$0xff] %v2760
        %2856 = vst [vmem:[%s309 + $0x8] sm:$0xff] %v2763
        %2857 = vst [vmem:[%s309 + $0x10] sm:$0xff] %v2766
        %2858 = vst [vmem:[%s309 + $0x18] sm:$0xff] %v2769
        %2859 = vst [vmem:[%s309 + $0x20] sm:$0xff] %v2772
        %2860 = vst [vmem:[%s309 + $0x28] sm:$0xff] %v2775
        %2861 = vst [vmem:[%s309 + $0x30] sm:$0xff] %v2778
        %2862 = vst [vmem:[%s309 + $0x38] sm:$0xff] %v2781
        %2863 = vst [vmem:[%s309 + $0x40] sm:$0xff] %v2784
        %2864 = vst [vmem:[%s309 + $0x48] sm:$0xff] %v2787
        %2865 = vst [vmem:[%s309 + $0x50] sm:$0xff] %v2790
        %2866 = vst [vmem:[%s309 + $0x58] sm:$0xff] %v2793
        %2867 = vst [vmem:[%s309 + $0x60] sm:$0xff] %v2796
        %2868 = vst [vmem:[%s309 + $0x68] sm:$0xff] %v2799
        %2869 = vst [vmem:[%s309 + $0x70] sm:$0xff] %v2802
        %2870 = vst [vmem:[%s309 + $0x78] sm:$0xff] %v2805
        %2871 = vst [vmem:[%s309 + $0x80] sm:$0xff] %v2808
        %2872 = vst [vmem:[%s309 + $0x88] sm:$0xff] %v2811
        %2873 = vst [vmem:[%s309 + $0x90] sm:$0xff] %v2814
        %2874 = vst [vmem:[%s309 + $0x98] sm:$0xff] %v2817
        %2875 = vst [vmem:[%s309 + $0xa0] sm:$0xff] %v2820
        %2876 = vst [vmem:[%s309 + $0xa8] sm:$0xff] %v2823
        %2877 = vst [vmem:[%s309 + $0xb0] sm:$0xff] %v2826
        %2878 = vst [vmem:[%s309 + $0xb8] sm:$0xff] %v2829
        %2879 = vst [vmem:[%s309 + $0xc0] sm:$0xff] %v2832
        %2880 = vst [vmem:[%s309 + $0xc8] sm:$0xff] %v2835
        %2881 = vst [vmem:[%s309 + $0xd0] sm:$0xff] %v2838
        %2882 = vst [vmem:[%s309 + $0xd8] sm:$0xff] %v2841
        %2883 = vst [vmem:[%s309 + $0xe0] sm:$0xff] %v2844
        %2884 = vst [vmem:[%s309 + $0xe8] sm:$0xff] %v2847
        %2885 = vst [vmem:[%s309 + $0xf0] sm:$0xff] %v2850
        %2886 = vst [vmem:[%s309 + $0xf8] sm:$0xff] %v2853
        %s2887 = sand.u32 %s149, 1
        %s2888 = scalar_lea.sflag [#allocation5], %s2887
        %s2889 = sand.u32 %s149, 1
        %s2890 = smul.addr %s2889, 512
        %s2891 = scalar_lea.vmem [#allocation6], %s2890
        %s2892 = sand.u32 %s177, 1
        %s2893 = scalar_lea.sflag [#allocation8], %s2892
        %s2894 = sand.u32 %s177, 1
        %s2895 = smul.addr %s2894, 256
        %s2896 = scalar_lea.vmem [#allocation7], %s2895
        // Predicated region
        $region45: #{tpu_custom_call.1} parent=35 // pred_check
          %p2897 = pneg %p159
        $region46: #{tpu_custom_call.1} parent=35 // pred_check_branch
          %2899 = sbr.rel (%p2897) target = $region48
        $region47: #{tpu_custom_call.1} parent=35 // pred_region
          %s2900 = smul.u32 32, %s30
          %2902 = vsyncadd %s2888, 0
          %s2903 = smul.addr %s2900, 2
          %s2904 = smul.addr %s31, 64
          %s2905 = sadd.s32 %s2903, %s2904
          %s2906 = smul.addr %s2905, 8
          %s2907 = scalar_lea.hbm %s4, %s2906
          %s2908 = sshll.u32 %s2891, 4
          %s2909 = int_to_ptr.vmem [resolvable:$true] %s2908
          %s2910 = sshll.u32 %s2907, 4
          %s2911 = int_to_ptr.hbm [resolvable:$true] %s2910
          %2916 = dma.vmem_to_hbm [thread:$0]  %s2909, 8192, %s2911, %s2888, 256, 256, 16
        $region48: #{tpu_custom_call.1} parent=35 // pred_fallthru
          _
        // Predicated region
        $region49: #{tpu_custom_call.1} parent=35 // pred_check
          %p2917 = pneg %p187
        $region50: #{tpu_custom_call.1} parent=35 // pred_check_branch
          %2919 = sbr.rel (%p2917) target = $region52
        $region51: #{tpu_custom_call.1} parent=35 // pred_region
          %s2920 = smul.u32 32, %s30
          %2922 = vsyncadd %s2893, 0
          %s2923 = smul.addr %s31, 32
          %s2924 = sadd.s32 %s2920, %s2923
          %s2925 = smul.addr %s2924, 8
          %s2926 = scalar_lea.hbm %s5, %s2925
          %s2927 = sshll.u32 %s2896, 4
          %s2928 = int_to_ptr.vmem [resolvable:$true] %s2927
          %s2929 = sshll.u32 %s2926, 4
          %s2930 = int_to_ptr.hbm [resolvable:$true] %s2929
          %2935 = dma.vmem_to_hbm [thread:$0]  %s2928, 4096, %s2930, %s2893, 128, 128, 8
        $region52: #{tpu_custom_call.1} parent=35 // pred_fallthru
          _
      $region36: #{tpu_custom_call.1} parent=5 // pred_fallthru
        _
      %p2936 = scmp.le.s32.totalorder 2, %s21
      // Predicated region
      $region53: #{tpu_custom_call.1} parent=5 // pred_check
        %p2937 = pneg %p2936
      $region54: #{tpu_custom_call.1} parent=5 // pred_check_branch
        %2939 = sbr.rel (%p2937) target = $region56
      $region55: #{tpu_custom_call.1} parent=5 // pred_region
        %s2940 = ssub.s32 %s21, 2
        // Predicated region
        $region57: #{tpu_custom_call.1} parent=55 // pred_check
          %p2941 = pneg %p165
        $region58: #{tpu_custom_call.1} parent=55 // pred_check_branch
          %2943 = sbr.rel (%p2941) target = $region60
        $region59: #{tpu_custom_call.1} parent=55 // pred_region
          %s2944 = sand.u32 %s150, 1
          %s2945 = scalar_lea.sflag [#allocation5], %s2944
          %s2946 = sand.u32 %s150, 1
          %s2947 = smul.addr %s2946, 512
          %s2948 = scalar_lea.vmem [#allocation6], %s2947
          %2950 = dma.done %s2945, 8192
        $region60: #{tpu_custom_call.1} parent=55 // pred_fallthru
          _
        // Predicated region
        $region61: #{tpu_custom_call.1} parent=55 // pred_check
          %p2951 = pneg %p193
        $region62: #{tpu_custom_call.1} parent=55 // pred_check_branch
          %2953 = sbr.rel (%p2951) target = $region64
        $region63: #{tpu_custom_call.1} parent=55 // pred_region
          %s2954 = sand.u32 %s178, 1
          %s2955 = scalar_lea.sflag [#allocation8], %s2954
          %s2956 = sand.u32 %s178, 1
          %s2957 = smul.addr %s2956, 256
          %s2958 = scalar_lea.vmem [#allocation7], %s2957
          %2960 = dma.done %s2955, 4096
        $region64: #{tpu_custom_call.1} parent=55 // pred_fallthru
          _
      $region56: #{tpu_custom_call.1} parent=5 // pred_fallthru
        _
    $region6: #{tpu_custom_call.1} parent=1 // loop_footer
      %s25 = sadd.s32 1, %s21
    $region7: #{tpu_custom_call.1} parent=1 // loop_footer_branch
      %20 = sbr.rel target = $region3
    $region8: #{tpu_custom_call.1} parent=1 // loop_exit
      _
    %2961 = vsyncpa [#allocation4], 1
    %s2962 = scalar_lea.sflag [#allocation4], 1
    %2963 = vsyncpa %s2962, 1
    %2964 = vsyncpa [#allocation5], 1
    %s2965 = scalar_lea.sflag [#allocation5], 1
    %2966 = vsyncpa %s2965, 1
    %2967 = vsyncpa [#allocation8], 1
    %s2968 = scalar_lea.sflag [#allocation8], 1
    %2969 = vsyncpa %s2968, 1

</llo_original>
